<compile_context>
chip_gen: v7x
topology: tpu7x:2x2x1
jax: 0.10.0
libtpu: 0.0.40
codegen_flags: <defaults>
</compile_context>

<pallas_src>
import math

import jax
import jax.numpy as jnp
from jax.experimental import pallas as pl
from jax.experimental.pallas import tpu as pltpu


def _brown_fc_kernel(x_ref, wg_ref, bg_ref, wf_ref, bf_ref, g_ref, f_ref):
    """Fused two-layer MLP (no activation), lane-dense outputs.

    x_ref : (TB, 4096)     bf16
    wg_ref: (4096, G_bit)  bf16    bg_ref: (1, G_bit) f32
    wf_ref: (G_bit, F_bit) bf16    bf_ref: (1, F_bit) f32
    g_ref : (TB, G_bit)    f32
    f_ref : (TB, F_bit)    f32
    """
    # First linear: bf16 operands, f32 accumulation on the MXU.
    g = jnp.dot(x_ref[...], wg_ref[...], preferred_element_type=jnp.float32)
    g = g + bg_ref[...]                       # (TB, G_bit) + (1, G_bit)
    g_ref[...] = g.astype(g_ref.dtype)

    # Second linear: cast activations to bf16 for the MXU, accumulate in f32.
    f = jnp.dot(g.astype(jnp.bfloat16), wf_ref[...],
                preferred_element_type=jnp.float32)
    f = f + bf_ref[...]                       # (TB, F_bit) + (1, F_bit)
    f_ref[...] = f.astype(f_ref.dtype)


def brown_fc_forward(x, wg, bg, wf, bf, *, block_b=128):
    """Fused BrownFcModel forward pass.

    x : (B, 4096)    wg: (4096, G_bit)  bg: (G_bit,) or (1, G_bit)
                     wf: (G_bit, F_bit) bf: (F_bit,) or (1, F_bit)
    Returns (G_out.T, F_out.T) = ((G_bit, B), (F_bit, B)) in f32,
    matching the PyTorch module's return.
    """
    B, in_dim = x.shape
    g_bit = wg.shape[1]
    f_bit = wf.shape[1]

    # Stream weights / activations in bf16 (MXU-native on v5e/v6e/v7x); keep
    # biases in f32 since they are added after the f32 accumulation.
    xb = x.astype(jnp.bfloat16)
    wgb = wg.astype(jnp.bfloat16)
    wfb = wf.astype(jnp.bfloat16)
    bg2 = jnp.reshape(bg, (1, g_bit)).astype(jnp.float32)
    bf2 = jnp.reshape(bf, (1, f_bit)).astype(jnp.float32)

    # Batch tiling: tile only when B divides cleanly into block_b rows;
    # otherwise run the whole (small) batch as one block.  A full-extent block
    # always satisfies the (8, 128) divisibility rule.
    tb = block_b if (B >= block_b and B % block_b == 0) else B
    grid = (B // tb,)

    flops = 2 * B * in_dim * g_bit + 2 * B * g_bit * f_bit
    bytes_accessed = (xb.size * 2 + wgb.size * 2 + wfb.size * 2 +
                      bg2.size * 4 + bf2.size * 4 +
                      B * g_bit * 4 + B * f_bit * 4)

    g_out, f_out = pl.pallas_call(
        _brown_fc_kernel,
        out_shape=(
            jax.ShapeDtypeStruct((B, g_bit), jnp.float32),
            jax.ShapeDtypeStruct((B, f_bit), jnp.float32),
        ),
        grid=grid,
        in_specs=[
            pl.BlockSpec((tb, in_dim), lambda i: (i, 0)),     # x tile
            pl.BlockSpec((in_dim, g_bit), lambda i: (0, 0)),  # Wg (resident)
            pl.BlockSpec((1, g_bit), lambda i: (0, 0)),       # bg (resident)
            pl.BlockSpec((g_bit, f_bit), lambda i: (0, 0)),   # Wf (resident)
            pl.BlockSpec((1, f_bit), lambda i: (0, 0)),       # bf (resident)
        ],
        out_specs=(
            pl.BlockSpec((tb, g_bit), lambda i: (i, 0)),      # lane-dense
            pl.BlockSpec((tb, f_bit), lambda i: (i, 0)),      # lane-dense
        ),
        compiler_params=pltpu.CompilerParams(
            dimension_semantics=("parallel",),
            vmem_limit_bytes=16 << 20,
        ),
        cost_estimate=pl.CostEstimate(
            flops=flops, bytes_accessed=bytes_accessed, transcendentals=0),
    )(xb, wgb, bg2, wfb, bf2)

    # The module returns transposed outputs; do the tiny (~few-KiB) transpose
    # outside the kernel so in-kernel stores stay lane-dense.
    return g_out.T, f_out.T


def init_params(key, in_dim, g_bit, f_bit):
    """Deterministic init mirroring the PyTorch module.

    Weights: kaiming_normal_(mode='fan_in', nonlinearity='relu')
             -> N(0, sqrt(2 / fan_in))
    Biases : default nn.Linear init -> U(-1/sqrt(fan_in), 1/sqrt(fan_in))
    Weights stored as (in, out) so the kernel computes x @ W.
    """
    k1, k2, k3, k4 = jax.random.split(key, 4)

    std_g = math.sqrt(2.0 / in_dim)
    wg = std_g * jax.random.normal(k1, (in_dim, g_bit), dtype=jnp.float32)
    bound_g = 1.0 / math.sqrt(in_dim)
    bg = jax.random.uniform(k2, (1, g_bit), minval=-bound_g, maxval=bound_g,
                            dtype=jnp.float32)

    std_f = math.sqrt(2.0 / g_bit)
    wf = std_f * jax.random.normal(k3, (g_bit, f_bit), dtype=jnp.float32)
    bound_f = 1.0 / math.sqrt(g_bit)
    bf = jax.random.uniform(k4, (1, f_bit), minval=-bound_f, maxval=bound_f,
                            dtype=jnp.float32)

    return wg, bg, wf, bf


if __name__ == "__main__":
    key = jax.random.PRNGKey(0)
    kx, kp = jax.random.split(key)

    B = 16         # small batch; tiled into two grid steps below
    IN_DIM = 4096  # fixed by the module (Linear(4096, G_bit))
    G_BIT = 128
    F_BIT = 32

    x = jax.random.normal(kx, (B, IN_DIM), dtype=jnp.float32)
    wg, bg, wf, bf = init_params(kp, IN_DIM, G_BIT, F_BIT)

    # block_b=8 -> grid=(2,) so the batch-tiled pipeline path is exercised.
    gt, ft = brown_fc_forward(x, wg, bg, wf, bf, block_b=8)
    gt, ft = jax.block_until_ready((gt, ft))

    # Reference in plain JAX, mirroring the kernel's bf16-operand / f32-accum
    # arithmetic so the comparison is apples-to-apples.
    xb = x.astype(jnp.bfloat16).astype(jnp.float32)
    wgb = wg.astype(jnp.bfloat16).astype(jnp.float32)
    wfb = wf.astype(jnp.bfloat16).astype(jnp.float32)
    g_ref = xb @ wgb + bg
    f_ref = g_ref.astype(jnp.bfloat16).astype(jnp.float32) @ wfb + bf

    assert gt.shape == (G_BIT, B) and ft.shape == (F_BIT, B)
    assert jnp.allclose(gt, g_ref.T, atol=1e-2, rtol=1e-2)
    assert jnp.allclose(ft, f_ref.T, atol=1e-2, rtol=1e-2)

    print("KERNEL_OK")
</pallas_src>

<mosaic_0001>
module attributes {stable_mosaic.version = 11 : i64} {
  func.func @_brown_fc_kernel(%arg0: i32, %arg1: memref<8x4096xbf16, #tpu.memory_space<vmem>>, %arg2: memref<4096x128xbf16, #tpu.memory_space<vmem>>, %arg3: memref<1x128xf32, #tpu.memory_space<vmem>>, %arg4: memref<128x32xbf16, #tpu.memory_space<vmem>>, %arg5: memref<1x32xf32, #tpu.memory_space<vmem>>, %arg6: memref<8x128xf32, #tpu.memory_space<vmem>>, %arg7: memref<8x32xf32, #tpu.memory_space<vmem>>) attributes {dimension_semantics = [#tpu.dimension_semantics<parallel>], iteration_bounds = array<i64: 2>, scalar_prefetch = 0 : i64, scratch_operands = 0 : i64, tpu.core_type = #tpu.core_type<tc>, window_params = [{transform_indices = @transform_0, window_bounds = array<i64: 8, 4096>}, {pipeline_mode = #tpu.pipeline_mode<synchronous>, transform_indices = @transform_1, window_bounds = array<i64: 4096, 128>}, {pipeline_mode = #tpu.pipeline_mode<synchronous>, transform_indices = @transform_2, window_bounds = array<i64: 1, 128>}, {pipeline_mode = #tpu.pipeline_mode<synchronous>, transform_indices = @transform_3, window_bounds = array<i64: 128, 32>}, {pipeline_mode = #tpu.pipeline_mode<synchronous>, transform_indices = @transform_4, window_bounds = array<i64: 1, 32>}, {transform_indices = @transform_5, window_bounds = array<i64: 8, 128>}, {transform_indices = @transform_6, window_bounds = array<i64: 8, 32>}]} {
    %c0 = arith.constant 0 : index
    %c0_0 = arith.constant 0 : index
    %0 = vector.load %arg1[%c0, %c0_0] : memref<8x4096xbf16, #tpu.memory_space<vmem>>, vector<8x4096xbf16>
    %c0_1 = arith.constant 0 : index
    %c0_2 = arith.constant 0 : index
    %1 = vector.load %arg2[%c0_1, %c0_2] : memref<4096x128xbf16, #tpu.memory_space<vmem>>, vector<4096x128xbf16>
    %cst = arith.constant dense<0.000000e+00> : vector<8x128xf32>
    %2 = tpu.matmul %0, %1, %cst {dimension_numbers = #tpu.dot_dimension_numbers<[1], [0], [0], [1], [0, 0, 1, 1], [], []>} : vector<8x4096xbf16>, vector<4096x128xbf16>, vector<8x128xf32> -> vector<8x128xf32>
    %c0_3 = arith.constant 0 : index
    %c0_4 = arith.constant 0 : index
    %3 = vector.load %arg3[%c0_3, %c0_4] : memref<1x128xf32, #tpu.memory_space<vmem>>, vector<1x128xf32>
    %4 = vector.broadcast %3 : vector<1x128xf32> to vector<8x128xf32>
    %5 = arith.addf %2, %4 : vector<8x128xf32>
    %c0_5 = arith.constant 0 : index
    %c0_6 = arith.constant 0 : index
    %6 = vector.load %arg6[%c0_5, %c0_6] : memref<8x128xf32, #tpu.memory_space<vmem>>, vector<8x128xf32>
    tpu.vector_store %arg6[%c0_5, %c0_6], %5 {strides = array<i32>} : memref<8x128xf32, #tpu.memory_space<vmem>>, vector<8x128xf32>,
    %7 = arith.truncf %5 : vector<8x128xf32> to vector<8x128xbf16>
    %c0_7 = arith.constant 0 : index
    %c0_8 = arith.constant 0 : index
    %8 = vector.load %arg4[%c0_7, %c0_8] : memref<128x32xbf16, #tpu.memory_space<vmem>>, vector<128x32xbf16>
    %cst_9 = arith.constant dense<0.000000e+00> : vector<8x32xf32>
    %9 = tpu.matmul %7, %8, %cst_9 {dimension_numbers = #tpu.dot_dimension_numbers<[1], [0], [0], [1], [0, 0, 1, 1], [], []>} : vector<8x128xbf16>, vector<128x32xbf16>, vector<8x32xf32> -> vector<8x32xf32>
    %c0_10 = arith.constant 0 : index
    %c0_11 = arith.constant 0 : index
    %10 = vector.load %arg5[%c0_10, %c0_11] : memref<1x32xf32, #tpu.memory_space<vmem>>, vector<1x32xf32>
    %11 = vector.broadcast %10 : vector<1x32xf32> to vector<8x32xf32>
    %12 = arith.addf %9, %11 : vector<8x32xf32>
    %c0_12 = arith.constant 0 : index
    %c0_13 = arith.constant 0 : index
    %13 = vector.load %arg7[%c0_12, %c0_13] : memref<8x32xf32, #tpu.memory_space<vmem>>, vector<8x32xf32>
    tpu.vector_store %arg7[%c0_12, %c0_13], %12 {strides = array<i32>} : memref<8x32xf32, #tpu.memory_space<vmem>>, vector<8x32xf32>,
    return
  }
  func.func @transform_0(%arg0: i32) -> (i32, i32) {
    %c0_i32 = arith.constant 0 : i32
    %c0_i32_0 = arith.constant 0 : i32
    return %arg0, %c0_i32 : i32, i32
  }
  func.func @transform_1(%arg0: i32) -> (i32, i32) {
    %c0_i32 = arith.constant 0 : i32
    %c0_i32_0 = arith.constant 0 : i32
    %c0_i32_1 = arith.constant 0 : i32
    return %c0_i32, %c0_i32_0 : i32, i32
  }
  func.func @transform_2(%arg0: i32) -> (i32, i32) {
    %c0_i32 = arith.constant 0 : i32
    %c0_i32_0 = arith.constant 0 : i32
    %c0_i32_1 = arith.constant 0 : i32
    return %c0_i32, %c0_i32_0 : i32, i32
  }
  func.func @transform_3(%arg0: i32) -> (i32, i32) {
    %c0_i32 = arith.constant 0 : i32
    %c0_i32_0 = arith.constant 0 : i32
    %c0_i32_1 = arith.constant 0 : i32
    return %c0_i32, %c0_i32_0 : i32, i32
  }
  func.func @transform_4(%arg0: i32) -> (i32, i32) {
    %c0_i32 = arith.constant 0 : i32
    %c0_i32_0 = arith.constant 0 : i32
    %c0_i32_1 = arith.constant 0 : i32
    return %c0_i32, %c0_i32_0 : i32, i32
  }
  func.func @transform_5(%arg0: i32) -> (i32, i32) {
    %c0_i32 = arith.constant 0 : i32
    %c0_i32_0 = arith.constant 0 : i32
    return %arg0, %c0_i32 : i32, i32
  }
  func.func @transform_6(%arg0: i32) -> (i32, i32) {
    %c0_i32 = arith.constant 0 : i32
    %c0_i32_0 = arith.constant 0 : i32
    return %arg0, %c0_i32 : i32, i32
  }
}

</mosaic_0001>

<llo_original>
// kernel: tpu_custom_call.1
$region0: #{tpu_custom_call.1}
  #allocation0 [shape = 'u32[]', space=smem, size = 0x4, offset = 0x4, fixed_abs, tag = 'smem constant byte address 0x4 - core index']
  #allocation1 [shape = 'u32[144,128]{1,0:T(1,128)}', space=vmem, size = 0x12000, scoped, tag = 'internal scratch']
  %s0 = inlined_call_operand.hbm [shape: bf16[16,4096], index: 0, kind: input, shape index: {}]
  %s1 = inlined_call_operand.hbm [shape: bf16[4096,128], index: 1, kind: input, shape index: {}]
  %s2 = inlined_call_operand.vmem [shape: f32[1,128], index: 2, kind: input, shape index: {}]
  %s3 = inlined_call_operand.vmem [shape: bf16[128,32], index: 3, kind: input, shape index: {}]
  %s4 = inlined_call_operand.vmem [shape: f32[1,32], index: 4, kind: input, shape index: {}]
  %s5 = inlined_call_operand.hbm [shape: f32[16,128], index: 5, kind: output, shape index: {0}]
  %s6 = inlined_call_operand.hbm [shape: f32[16,32], index: 6, kind: output, shape index: {1}]
  %7 = xla_tuple %s5, %s6
  %s8 = sld [smem:[#allocation0]]
  $region69: #{tpu_custom_call.1} parent=0
    _
  %s10 = ssub.s32 1, %s8
  %s11 = scalar_select 0, %s10, %s8
  $region1: #{tpu_custom_call.1} parent=0
    #allocation2 [shape = 'u8[131072]{0}', space=vmem, size = 0x20000, scoped, tag = 'input window, operand 0']
    #allocation3 [shape = 's32[2]{0}', space=sflag, size = 0x8, scoped, tag = 'scoped memory for tpu_custom_call.1']
    #allocation4 [shape = 's32[2]{0}', space=sflag, size = 0x8, scoped, tag = 'scoped memory for tpu_custom_call.1']
    #allocation5 [shape = 'u8[1048576]{0}', space=vmem, size = 0x100000, scoped, tag = 'input window, operand 1, single buffered']
    #allocation6 [shape = 's32[1]{0}', space=sflag, size = 0x4, scoped, tag = 'scoped memory for tpu_custom_call.1']
    #allocation7 [shape = 'u8[8192]{0}', space=vmem, size = 0x2000, scoped, tag = 'output window, operand 0']
    #allocation8 [shape = 'u8[8192]{0}', space=vmem, size = 0x2000, scoped, tag = 'output window, operand 1']
    #allocation9 [shape = 's32[2]{0}', space=sflag, size = 0x8, scoped, tag = 'scoped memory for tpu_custom_call.1']
    %12 = vsyncpa [#allocation3], 0
    %s13 = scalar_lea.sflag [#allocation3], 1
    %14 = vsyncpa %s13, 0
    %15 = vsyncpa [#allocation6], 0
    %16 = vsyncpa [#allocation4], 0
    %s17 = scalar_lea.sflag [#allocation4], 1
    %18 = vsyncpa %s17, 0
    %19 = vsyncpa [#allocation9], 0
    %s20 = scalar_lea.sflag [#allocation9], 1
    %21 = vsyncpa %s20, 0
    loop: start=0, step=1, limit=4
    $region2: #{tpu_custom_call.1} parent=1 // loop_pre_header
      _
    $region3: #{tpu_custom_call.1} parent=1 // loop_header
      %s23 = sphi 0, %s27
      %p24 = scmp.ge.s32.totalorder %s23, 4
      %s33 = sphi 0, %s35
      %s36 = sphi 0, %s33
      %s37 = sphi 0, %s36
      %s53 = sphi 0, %s37
      %s57 = sphi 0, %s57
      %s59 = sphi 0, %s57
      %s60 = sphi 0, %s59
      %s74 = sphi 0, %s60
      %s78 = sphi 0, %s78
      %s80 = sphi 0, %s78
      %s81 = sphi 0, %s80
      %s95 = sphi 0, %s81
      %s99 = sphi 0, %s99
      %s101 = sphi 0, %s99
      %s102 = sphi 0, %s101
      %s116 = sphi 0, %s102
      %s120 = sphi 0, %s120
      %s122 = sphi 0, %s120
      %s123 = sphi 0, %s122
      %s137 = sphi 0, %s123
      %s143 = sphi 0, %s145
      %s146 = sphi 0, %s143
      %s147 = sphi 0, %s146
      %s163 = sphi 0, %s147
      %s169 = sphi 0, %s171
      %s172 = sphi 0, %s169
      %s173 = sphi 0, %s172
      %s189 = sphi 0, %s173
    $region4: #{tpu_custom_call.1} parent=1 // loop_header_branch
      %26 = sbr.rel (%p24) target = $region8
    $region5: #{tpu_custom_call.1} parent=1 // loop_body
      %s28 = ssub.s32 %s23, 1
      %s29 = ssub.s32 %s23, 2
      %s30 = sadd.s32 %s23, 1
      %s31 = ssub.s32 %s23, %s30
      %p32 = scmp.eq.s32.totalorder %s31, 0
      %s34 = sadd.s32 %s33, 1
      %s35 = scalar_select %p32, %s33, %s34
      %p38 = pneg %p32
      %p39 = scmp.eq.s32.totalorder %s23, 1
      %p40 = por %p38, %p39
      %p41 = scmp.ne.s32.totalorder %s33, %s36
      %p42 = scmp.eq.s32.totalorder %s23, 0
      %p43 = por %p41, %p42
      %p44 = scmp.ne.s32.totalorder %s33, %s36
      %p45 = scmp.eq.s32.totalorder %s28, 1
      %p46 = por %p44, %p45
      %p47 = scmp.ne.s32.totalorder %s36, %s37
      %p48 = scmp.eq.s32.totalorder %s28, 0
      %p49 = por %p47, %p48
      %p50 = scmp.ne.s32.totalorder %s36, %s37
      %p51 = scmp.eq.s32.totalorder %s29, 1
      %p52 = por %p50, %p51
      %p54 = scmp.ne.s32.totalorder %s37, %s53
      %p55 = scmp.eq.s32.totalorder %s29, 0
      %p56 = por %p54, %p55
      %s58 = sadd.s32 %s57, 1
      %p61 = scmp.eq.s32.totalorder %s23, 1
      %p62 = scmp.ne.s32.totalorder %s57, %s59
      %p63 = scmp.eq.s32.totalorder %s23, 0
      %p64 = por %p62, %p63
      %p65 = scmp.ne.s32.totalorder %s57, %s59
      %p66 = scmp.eq.s32.totalorder %s28, 1
      %p67 = por %p65, %p66
      %p68 = scmp.ne.s32.totalorder %s59, %s60
      %p69 = scmp.eq.s32.totalorder %s28, 0
      %p70 = por %p68, %p69
      %p71 = scmp.ne.s32.totalorder %s59, %s60
      %p72 = scmp.eq.s32.totalorder %s29, 1
      %p73 = por %p71, %p72
      %p75 = scmp.ne.s32.totalorder %s60, %s74
      %p76 = scmp.eq.s32.totalorder %s29, 0
      %p77 = por %p75, %p76
      %s79 = sadd.s32 %s78, 1
      %p82 = scmp.eq.s32.totalorder %s23, 1
      %p83 = scmp.ne.s32.totalorder %s78, %s80
      %p84 = scmp.eq.s32.totalorder %s23, 0
      %p85 = por %p83, %p84
      %p86 = scmp.ne.s32.totalorder %s78, %s80
      %p87 = scmp.eq.s32.totalorder %s28, 1
      %p88 = por %p86, %p87
      %p89 = scmp.ne.s32.totalorder %s80, %s81
      %p90 = scmp.eq.s32.totalorder %s28, 0
      %p91 = por %p89, %p90
      %p92 = scmp.ne.s32.totalorder %s80, %s81
      %p93 = scmp.eq.s32.totalorder %s29, 1
      %p94 = por %p92, %p93
      %p96 = scmp.ne.s32.totalorder %s81, %s95
      %p97 = scmp.eq.s32.totalorder %s29, 0
      %p98 = por %p96, %p97
      %s100 = sadd.s32 %s99, 1
      %p103 = scmp.eq.s32.totalorder %s23, 1
      %p104 = scmp.ne.s32.totalorder %s99, %s101
      %p105 = scmp.eq.s32.totalorder %s23, 0
      %p106 = por %p104, %p105
      %p107 = scmp.ne.s32.totalorder %s99, %s101
      %p108 = scmp.eq.s32.totalorder %s28, 1
      %p109 = por %p107, %p108
      %p110 = scmp.ne.s32.totalorder %s101, %s102
      %p111 = scmp.eq.s32.totalorder %s28, 0
      %p112 = por %p110, %p111
      %p113 = scmp.ne.s32.totalorder %s101, %s102
      %p114 = scmp.eq.s32.totalorder %s29, 1
      %p115 = por %p113, %p114
      %p117 = scmp.ne.s32.totalorder %s102, %s116
      %p118 = scmp.eq.s32.totalorder %s29, 0
      %p119 = por %p117, %p118
      %s121 = sadd.s32 %s120, 1
      %p124 = scmp.eq.s32.totalorder %s23, 1
      %p125 = scmp.ne.s32.totalorder %s120, %s122
      %p126 = scmp.eq.s32.totalorder %s23, 0
      %p127 = por %p125, %p126
      %p128 = scmp.ne.s32.totalorder %s120, %s122
      %p129 = scmp.eq.s32.totalorder %s28, 1
      %p130 = por %p128, %p129
      %p131 = scmp.ne.s32.totalorder %s122, %s123
      %p132 = scmp.eq.s32.totalorder %s28, 0
      %p133 = por %p131, %p132
      %p134 = scmp.ne.s32.totalorder %s122, %s123
      %p135 = scmp.eq.s32.totalorder %s29, 1
      %p136 = por %p134, %p135
      %p138 = scmp.ne.s32.totalorder %s123, %s137
      %p139 = scmp.eq.s32.totalorder %s29, 0
      %p140 = por %p138, %p139
      %s141 = ssub.s32 %s23, %s30
      %p142 = scmp.eq.s32.totalorder %s141, 0
      %s144 = sadd.s32 %s143, 1
      %s145 = scalar_select %p142, %s143, %s144
      %p148 = pneg %p142
      %p149 = scmp.eq.s32.totalorder %s23, 1
      %p150 = por %p148, %p149
      %p151 = scmp.ne.s32.totalorder %s143, %s146
      %p152 = scmp.eq.s32.totalorder %s23, 0
      %p153 = por %p151, %p152
      %p154 = scmp.ne.s32.totalorder %s143, %s146
      %p155 = scmp.eq.s32.totalorder %s28, 1
      %p156 = por %p154, %p155
      %p157 = scmp.ne.s32.totalorder %s146, %s147
      %p158 = scmp.eq.s32.totalorder %s28, 0
      %p159 = por %p157, %p158
      %p160 = scmp.ne.s32.totalorder %s146, %s147
      %p161 = scmp.eq.s32.totalorder %s29, 1
      %p162 = por %p160, %p161
      %p164 = scmp.ne.s32.totalorder %s147, %s163
      %p165 = scmp.eq.s32.totalorder %s29, 0
      %p166 = por %p164, %p165
      %s167 = ssub.s32 %s23, %s30
      %p168 = scmp.eq.s32.totalorder %s167, 0
      %s170 = sadd.s32 %s169, 1
      %s171 = scalar_select %p168, %s169, %s170
      %p174 = pneg %p168
      %p175 = scmp.eq.s32.totalorder %s23, 1
      %p176 = por %p174, %p175
      %p177 = scmp.ne.s32.totalorder %s169, %s172
      %p178 = scmp.eq.s32.totalorder %s23, 0
      %p179 = por %p177, %p178
      %p180 = scmp.ne.s32.totalorder %s169, %s172
      %p181 = scmp.eq.s32.totalorder %s28, 1
      %p182 = por %p180, %p181
      %p183 = scmp.ne.s32.totalorder %s172, %s173
      %p184 = scmp.eq.s32.totalorder %s28, 0
      %p185 = por %p183, %p184
      %p186 = scmp.ne.s32.totalorder %s172, %s173
      %p187 = scmp.eq.s32.totalorder %s29, 1
      %p188 = por %p186, %p187
      %p190 = scmp.ne.s32.totalorder %s173, %s189
      %p191 = scmp.eq.s32.totalorder %s29, 0
      %p192 = por %p190, %p191
      %p193 = scmp.le.s32.totalorder 1, %s23
      %p194 = scmp.lt.s32.totalorder %s23, 3
      %p195 = pnand %p193, %p194
      %p196 = pneg %p195
      // Predicated region
      $region9: #{tpu_custom_call.1} parent=5 // pred_check
        _
      $region10: #{tpu_custom_call.1} parent=5 // pred_check_branch
        %198 = sbr.rel (%p195) target = $region12
      $region11: #{tpu_custom_call.1} parent=5 // pred_region
        %s199 = ssub.s32 %s23, 1
        // Predicated region
        $region13: #{tpu_custom_call.1} parent=11 // pred_check
          %p200 = pneg %p70
        $region14: #{tpu_custom_call.1} parent=11 // pred_check_branch
          %202 = sbr.rel (%p200) target = $region16
        $region15: #{tpu_custom_call.1} parent=11 // pred_region
          %s204 = ssub.s32 32768, 32768
          %205 = vsyncadd [#allocation6], %s204
          %s206 = sshll.u32 [#allocation5], 4
          %s207 = int_to_ptr.vmem [resolvable:$true] %s206
          %212 = dma.hbm_to_vmem [thread:$0]  %s1, 32768, %s207, [#allocation6], 64, 64, 4
        $region16: #{tpu_custom_call.1} parent=11 // pred_fallthru
          _
        // Predicated region
        $region17: #{tpu_custom_call.1} parent=11 // pred_check
          %p213 = pneg %p91
        $region18: #{tpu_custom_call.1} parent=11 // pred_check_branch
          %215 = sbr.rel (%p213) target = $region20
        $region19: #{tpu_custom_call.1} parent=11 // pred_region
          _
        $region20: #{tpu_custom_call.1} parent=11 // pred_fallthru
          _
        // Predicated region
        $region21: #{tpu_custom_call.1} parent=11 // pred_check
          %p216 = pneg %p112
        $region22: #{tpu_custom_call.1} parent=11 // pred_check_branch
          %218 = sbr.rel (%p216) target = $region24
        $region23: #{tpu_custom_call.1} parent=11 // pred_region
          _
        $region24: #{tpu_custom_call.1} parent=11 // pred_fallthru
          _
        // Predicated region
        $region25: #{tpu_custom_call.1} parent=11 // pred_check
          %p219 = pneg %p133
        $region26: #{tpu_custom_call.1} parent=11 // pred_check_branch
          %221 = sbr.rel (%p219) target = $region28
        $region27: #{tpu_custom_call.1} parent=11 // pred_region
          _
        $region28: #{tpu_custom_call.1} parent=11 // pred_fallthru
          _
      $region12: #{tpu_custom_call.1} parent=5 // pred_fallthru
        _
      %p222 = scmp.lt.s32.totalorder %s23, 2
      // Predicated region
      $region29: #{tpu_custom_call.1} parent=5 // pred_check
        %p223 = pneg %p222
      $region30: #{tpu_custom_call.1} parent=5 // pred_check_branch
        %225 = sbr.rel (%p223) target = $region32
      $region31: #{tpu_custom_call.1} parent=5 // pred_region
        // Predicated region
        $region33: #{tpu_custom_call.1} parent=31 // pred_check
          %p226 = pneg %p43
        $region34: #{tpu_custom_call.1} parent=31 // pred_check_branch
          %228 = sbr.rel (%p226) target = $region36
        $region35: #{tpu_custom_call.1} parent=31 // pred_region
          %s229 = sand.u32 %s33, 1
          %s230 = scalar_lea.sflag [#allocation3], %s229
          %s231 = sand.u32 %s33, 1
          %s232 = smul.addr %s231, 128
          %s233 = scalar_lea.vmem [#allocation2], %s232
          %s235 = ssub.s32 2048, 2048
          %236 = vsyncadd %s230, %s235
          %s237 = smul.addr %s23, 32
          %s238 = smul.addr %s237, 64
          %s239 = scalar_lea.hbm %s0, %s238
          %s241 = sshll.u32 %s233, 4
          %s242 = int_to_ptr.vmem [resolvable:$true] %s241
          %244 = dma.hbm_to_vmem [thread:$0]  %s239, 2048, %s242, %s230
        $region36: #{tpu_custom_call.1} parent=31 // pred_fallthru
          _
      $region32: #{tpu_custom_call.1} parent=5 // pred_fallthru
        _
      %p245 = scmp.le.s32.totalorder 1, %s23
      %p246 = scmp.lt.s32.totalorder %s23, 3
      %p247 = pnand %p245, %p246
      %p248 = pneg %p247
      // Predicated region
      $region37: #{tpu_custom_call.1} parent=5 // pred_check
        _
      $region38: #{tpu_custom_call.1} parent=5 // pred_check_branch
        %250 = sbr.rel (%p247) target = $region40
      $region39: #{tpu_custom_call.1} parent=5 // pred_region
        %s251 = ssub.s32 %s23, 1
        %s252 = sand.u32 %s36, 1
        %s253 = scalar_lea.sflag [#allocation3], %s252
        %s254 = sand.u32 %s36, 1
        %s255 = smul.addr %s254, 128
        %s256 = scalar_lea.vmem [#allocation2], %s255
        // Predicated region
        $region41: #{tpu_custom_call.1} parent=39 // pred_check
          %p257 = pneg %p49
        $region42: #{tpu_custom_call.1} parent=39 // pred_check_branch
          %259 = sbr.rel (%p257) target = $region44
        $region43: #{tpu_custom_call.1} parent=39 // pred_region
          %260 = dma.done %s253, 2048
        $region44: #{tpu_custom_call.1} parent=39 // pred_fallthru
          _
        // Predicated region
        $region45: #{tpu_custom_call.1} parent=39 // pred_check
          %p261 = pneg %p70
        $region46: #{tpu_custom_call.1} parent=39 // pred_check_branch
          %263 = sbr.rel (%p261) target = $region48
        $region47: #{tpu_custom_call.1} parent=39 // pred_region
          %264 = dma.done [#allocation6], 32768
        $region48: #{tpu_custom_call.1} parent=39 // pred_fallthru
          _
        %s265 = sand.u32 %s36, 1
        %s266 = scalar_lea.sflag [#allocation3], %s265
        %s267 = sand.u32 %s36, 1
        %s268 = smul.addr %s267, 128
        %s269 = scalar_lea.vmem [#allocation2], %s268
        %p270 = pneg %p49
        %p271 = pneg %p46
        %p272 = pneg %p70
        %p273 = pneg %p67
        %p274 = pneg %p91
        %p275 = pneg %p88
        %p276 = pneg %p112
        %p277 = pneg %p109
        %p278 = pneg %p133
        %p279 = pneg %p130
        %p280 = pneg %p159
        %p281 = pneg %p156
        %s282 = sand.u32 %s146, 1
        %s283 = scalar_lea.sflag [#allocation4], %s282
        %s284 = sand.u32 %s146, 1
        %s285 = smul.addr %s284, 8
        %s286 = scalar_lea.vmem [#allocation7], %s285
        %p287 = pneg %p185
        %p288 = pneg %p182
        %s289 = sand.u32 %s172, 1
        %s290 = scalar_lea.sflag [#allocation9], %s289
        %s291 = sand.u32 %s172, 1
        %s292 = smul.addr %s291, 8
        %s293 = scalar_lea.vmem [#allocation8], %s292
        %v295 = vld [vmem:[%s256] sm:$0xff]
        %v296 = vld [vmem:[%s256 + $0x8] sm:$0xff]
        %v297 = vld [vmem:[%s256 + $0x10] sm:$0xff]
        %v298 = vld [vmem:[%s256 + $0x18] sm:$0xff]
        %v299 = vld [vmem:[%s256 + $0x20] sm:$0xff]
        %v300 = vld [vmem:[%s256 + $0x28] sm:$0xff]
        %v301 = vld [vmem:[%s256 + $0x30] sm:$0xff]
        %v302 = vld [vmem:[%s256 + $0x38] sm:$0xff]
        %v303 = vld [vmem:[%s256 + $0x40] sm:$0xff]
        %v304 = vld [vmem:[%s256 + $0x48] sm:$0xff]
        %v305 = vld [vmem:[%s256 + $0x50] sm:$0xff]
        %v306 = vld [vmem:[%s256 + $0x58] sm:$0xff]
        %v307 = vld [vmem:[%s256 + $0x60] sm:$0xff]
        %v308 = vld [vmem:[%s256 + $0x68] sm:$0xff]
        %v309 = vld [vmem:[%s256 + $0x70] sm:$0xff]
        %v310 = vld [vmem:[%s256 + $0x78] sm:$0xff]
        %v311 = vld [vmem:[#allocation5] sm:$0xf]
        %v312 = vld [vmem:[#allocation5 + $0x4] sm:$0xf]
        %v313 = vld [vmem:[#allocation5 + $0x8] sm:$0xf]
        %v314 = vld [vmem:[#allocation5 + $0xc] sm:$0xf]
        %v315 = vld [vmem:[#allocation5 + $0x10] sm:$0xf]
        %v316 = vld [vmem:[#allocation5 + $0x14] sm:$0xf]
        %v317 = vld [vmem:[#allocation5 + $0x18] sm:$0xf]
        %v318 = vld [vmem:[#allocation5 + $0x1c] sm:$0xf]
        %v319 = vld [vmem:[#allocation5 + $0x20] sm:$0xf]
        %v320 = vld [vmem:[#allocation5 + $0x24] sm:$0xf]
        %v321 = vld [vmem:[#allocation5 + $0x28] sm:$0xf]
        %v322 = vld [vmem:[#allocation5 + $0x2c] sm:$0xf]
        %v323 = vld [vmem:[#allocation5 + $0x30] sm:$0xf]
        %v324 = vld [vmem:[#allocation5 + $0x34] sm:$0xf]
        %v325 = vld [vmem:[#allocation5 + $0x38] sm:$0xf]
        %v326 = vld [vmem:[#allocation5 + $0x3c] sm:$0xf]
        %v327 = vld [vmem:[#allocation5 + $0x40] sm:$0xf]
        %v328 = vld [vmem:[#allocation5 + $0x44] sm:$0xf]
        %v329 = vld [vmem:[#allocation5 + $0x48] sm:$0xf]
        %v330 = vld [vmem:[#allocation5 + $0x4c] sm:$0xf]
        %v331 = vld [vmem:[#allocation5 + $0x50] sm:$0xf]
        %v332 = vld [vmem:[#allocation5 + $0x54] sm:$0xf]
        %v333 = vld [vmem:[#allocation5 + $0x58] sm:$0xf]
        %v334 = vld [vmem:[#allocation5 + $0x5c] sm:$0xf]
        %v335 = vld [vmem:[#allocation5 + $0x60] sm:$0xf]
        %v336 = vld [vmem:[#allocation5 + $0x64] sm:$0xf]
        %v337 = vld [vmem:[#allocation5 + $0x68] sm:$0xf]
        %v338 = vld [vmem:[#allocation5 + $0x6c] sm:$0xf]
        %v339 = vld [vmem:[#allocation5 + $0x70] sm:$0xf]
        %v340 = vld [vmem:[#allocation5 + $0x74] sm:$0xf]
        %v341 = vld [vmem:[#allocation5 + $0x78] sm:$0xf]
        %v342 = vld [vmem:[#allocation5 + $0x7c] sm:$0xf]
        %v343 = vld [vmem:[#allocation5 + $0x80] sm:$0xf]
        %v344 = vld [vmem:[#allocation5 + $0x84] sm:$0xf]
        %v345 = vld [vmem:[#allocation5 + $0x88] sm:$0xf]
        %v346 = vld [vmem:[#allocation5 + $0x8c] sm:$0xf]
        %v347 = vld [vmem:[#allocation5 + $0x90] sm:$0xf]
        %v348 = vld [vmem:[#allocation5 + $0x94] sm:$0xf]
        %v349 = vld [vmem:[#allocation5 + $0x98] sm:$0xf]
        %v350 = vld [vmem:[#allocation5 + $0x9c] sm:$0xf]
        %v351 = vld [vmem:[#allocation5 + $0xa0] sm:$0xf]
        %v352 = vld [vmem:[#allocation5 + $0xa4] sm:$0xf]
        %v353 = vld [vmem:[#allocation5 + $0xa8] sm:$0xf]
        %v354 = vld [vmem:[#allocation5 + $0xac] sm:$0xf]
        %v355 = vld [vmem:[#allocation5 + $0xb0] sm:$0xf]
        %v356 = vld [vmem:[#allocation5 + $0xb4] sm:$0xf]
        %v357 = vld [vmem:[#allocation5 + $0xb8] sm:$0xf]
        %v358 = vld [vmem:[#allocation5 + $0xbc] sm:$0xf]
        %v359 = vld [vmem:[#allocation5 + $0xc0] sm:$0xf]
        %v360 = vld [vmem:[#allocation5 + $0xc4] sm:$0xf]
        %v361 = vld [vmem:[#allocation5 + $0xc8] sm:$0xf]
        %v362 = vld [vmem:[#allocation5 + $0xcc] sm:$0xf]
        %v363 = vld [vmem:[#allocation5 + $0xd0] sm:$0xf]
        %v364 = vld [vmem:[#allocation5 + $0xd4] sm:$0xf]
        %v365 = vld [vmem:[#allocation5 + $0xd8] sm:$0xf]
        %v366 = vld [vmem:[#allocation5 + $0xdc] sm:$0xf]
        %v367 = vld [vmem:[#allocation5 + $0xe0] sm:$0xf]
        %v368 = vld [vmem:[#allocation5 + $0xe4] sm:$0xf]
        %v369 = vld [vmem:[#allocation5 + $0xe8] sm:$0xf]
        %v370 = vld [vmem:[#allocation5 + $0xec] sm:$0xf]
        %v371 = vld [vmem:[#allocation5 + $0xf0] sm:$0xf]
        %v372 = vld [vmem:[#allocation5 + $0xf4] sm:$0xf]
        %v373 = vld [vmem:[#allocation5 + $0xf8] sm:$0xf]
        %v374 = vld [vmem:[#allocation5 + $0xfc] sm:$0xf]
        %v375 = vld [vmem:[#allocation5 + $0x100] sm:$0xf]
        %v376 = vld [vmem:[#allocation5 + $0x104] sm:$0xf]
        %v377 = vld [vmem:[#allocation5 + $0x108] sm:$0xf]
        %v378 = vld [vmem:[#allocation5 + $0x10c] sm:$0xf]
        %v379 = vld [vmem:[#allocation5 + $0x110] sm:$0xf]
        %v380 = vld [vmem:[#allocation5 + $0x114] sm:$0xf]
        %v381 = vld [vmem:[#allocation5 + $0x118] sm:$0xf]
        %v382 = vld [vmem:[#allocation5 + $0x11c] sm:$0xf]
        %v383 = vld [vmem:[#allocation5 + $0x120] sm:$0xf]
        %v384 = vld [vmem:[#allocation5 + $0x124] sm:$0xf]
        %v385 = vld [vmem:[#allocation5 + $0x128] sm:$0xf]
        %v386 = vld [vmem:[#allocation5 + $0x12c] sm:$0xf]
        %v387 = vld [vmem:[#allocation5 + $0x130] sm:$0xf]
        %v388 = vld [vmem:[#allocation5 + $0x134] sm:$0xf]
        %v389 = vld [vmem:[#allocation5 + $0x138] sm:$0xf]
        %v390 = vld [vmem:[#allocation5 + $0x13c] sm:$0xf]
        %v391 = vld [vmem:[#allocation5 + $0x140] sm:$0xf]
        %v392 = vld [vmem:[#allocation5 + $0x144] sm:$0xf]
        %v393 = vld [vmem:[#allocation5 + $0x148] sm:$0xf]
        %v394 = vld [vmem:[#allocation5 + $0x14c] sm:$0xf]
        %v395 = vld [vmem:[#allocation5 + $0x150] sm:$0xf]
        %v396 = vld [vmem:[#allocation5 + $0x154] sm:$0xf]
        %v397 = vld [vmem:[#allocation5 + $0x158] sm:$0xf]
        %v398 = vld [vmem:[#allocation5 + $0x15c] sm:$0xf]
        %v399 = vld [vmem:[#allocation5 + $0x160] sm:$0xf]
        %v400 = vld [vmem:[#allocation5 + $0x164] sm:$0xf]
        %v401 = vld [vmem:[#allocation5 + $0x168] sm:$0xf]
        %v402 = vld [vmem:[#allocation5 + $0x16c] sm:$0xf]
        %v403 = vld [vmem:[#allocation5 + $0x170] sm:$0xf]
        %v404 = vld [vmem:[#allocation5 + $0x174] sm:$0xf]
        %v405 = vld [vmem:[#allocation5 + $0x178] sm:$0xf]
        %v406 = vld [vmem:[#allocation5 + $0x17c] sm:$0xf]
        %v407 = vld [vmem:[#allocation5 + $0x180] sm:$0xf]
        %v408 = vld [vmem:[#allocation5 + $0x184] sm:$0xf]
        %v409 = vld [vmem:[#allocation5 + $0x188] sm:$0xf]
        %v410 = vld [vmem:[#allocation5 + $0x18c] sm:$0xf]
        %v411 = vld [vmem:[#allocation5 + $0x190] sm:$0xf]
        %v412 = vld [vmem:[#allocation5 + $0x194] sm:$0xf]
        %v413 = vld [vmem:[#allocation5 + $0x198] sm:$0xf]
        %v414 = vld [vmem:[#allocation5 + $0x19c] sm:$0xf]
        %v415 = vld [vmem:[#allocation5 + $0x1a0] sm:$0xf]
        %v416 = vld [vmem:[#allocation5 + $0x1a4] sm:$0xf]
        %v417 = vld [vmem:[#allocation5 + $0x1a8] sm:$0xf]
        %v418 = vld [vmem:[#allocation5 + $0x1ac] sm:$0xf]
        %v419 = vld [vmem:[#allocation5 + $0x1b0] sm:$0xf]
        %v420 = vld [vmem:[#allocation5 + $0x1b4] sm:$0xf]
        %v421 = vld [vmem:[#allocation5 + $0x1b8] sm:$0xf]
        %v422 = vld [vmem:[#allocation5 + $0x1bc] sm:$0xf]
        %v423 = vld [vmem:[#allocation5 + $0x1c0] sm:$0xf]
        %v424 = vld [vmem:[#allocation5 + $0x1c4] sm:$0xf]
        %v425 = vld [vmem:[#allocation5 + $0x1c8] sm:$0xf]
        %v426 = vld [vmem:[#allocation5 + $0x1cc] sm:$0xf]
        %v427 = vld [vmem:[#allocation5 + $0x1d0] sm:$0xf]
        %v428 = vld [vmem:[#allocation5 + $0x1d4] sm:$0xf]
        %v429 = vld [vmem:[#allocation5 + $0x1d8] sm:$0xf]
        %v430 = vld [vmem:[#allocation5 + $0x1dc] sm:$0xf]
        %v431 = vld [vmem:[#allocation5 + $0x1e0] sm:$0xf]
        %v432 = vld [vmem:[#allocation5 + $0x1e4] sm:$0xf]
        %v433 = vld [vmem:[#allocation5 + $0x1e8] sm:$0xf]
        %v434 = vld [vmem:[#allocation5 + $0x1ec] sm:$0xf]
        %v435 = vld [vmem:[#allocation5 + $0x1f0] sm:$0xf]
        %v436 = vld [vmem:[#allocation5 + $0x1f4] sm:$0xf]
        %v437 = vld [vmem:[#allocation5 + $0x1f8] sm:$0xf]
        %v438 = vld [vmem:[#allocation5 + $0x1fc] sm:$0xf]
        %v439 = vld [vmem:[#allocation5 + $0x200] sm:$0xf]
        %v440 = vld [vmem:[#allocation5 + $0x204] sm:$0xf]
        %v441 = vld [vmem:[#allocation5 + $0x208] sm:$0xf]
        %v442 = vld [vmem:[#allocation5 + $0x20c] sm:$0xf]
        %v443 = vld [vmem:[#allocation5 + $0x210] sm:$0xf]
        %v444 = vld [vmem:[#allocation5 + $0x214] sm:$0xf]
        %v445 = vld [vmem:[#allocation5 + $0x218] sm:$0xf]
        %v446 = vld [vmem:[#allocation5 + $0x21c] sm:$0xf]
        %v447 = vld [vmem:[#allocation5 + $0x220] sm:$0xf]
        %v448 = vld [vmem:[#allocation5 + $0x224] sm:$0xf]
        %v449 = vld [vmem:[#allocation5 + $0x228] sm:$0xf]
        %v450 = vld [vmem:[#allocation5 + $0x22c] sm:$0xf]
        %v451 = vld [vmem:[#allocation5 + $0x230] sm:$0xf]
        %v452 = vld [vmem:[#allocation5 + $0x234] sm:$0xf]
        %v453 = vld [vmem:[#allocation5 + $0x238] sm:$0xf]
        %v454 = vld [vmem:[#allocation5 + $0x23c] sm:$0xf]
        %v455 = vld [vmem:[#allocation5 + $0x240] sm:$0xf]
        %v456 = vld [vmem:[#allocation5 + $0x244] sm:$0xf]
        %v457 = vld [vmem:[#allocation5 + $0x248] sm:$0xf]
        %v458 = vld [vmem:[#allocation5 + $0x24c] sm:$0xf]
        %v459 = vld [vmem:[#allocation5 + $0x250] sm:$0xf]
        %v460 = vld [vmem:[#allocation5 + $0x254] sm:$0xf]
        %v461 = vld [vmem:[#allocation5 + $0x258] sm:$0xf]
        %v462 = vld [vmem:[#allocation5 + $0x25c] sm:$0xf]
        %v463 = vld [vmem:[#allocation5 + $0x260] sm:$0xf]
        %v464 = vld [vmem:[#allocation5 + $0x264] sm:$0xf]
        %v465 = vld [vmem:[#allocation5 + $0x268] sm:$0xf]
        %v466 = vld [vmem:[#allocation5 + $0x26c] sm:$0xf]
        %v467 = vld [vmem:[#allocation5 + $0x270] sm:$0xf]
        %v468 = vld [vmem:[#allocation5 + $0x274] sm:$0xf]
        %v469 = vld [vmem:[#allocation5 + $0x278] sm:$0xf]
        %v470 = vld [vmem:[#allocation5 + $0x27c] sm:$0xf]
        %v471 = vld [vmem:[#allocation5 + $0x280] sm:$0xf]
        %v472 = vld [vmem:[#allocation5 + $0x284] sm:$0xf]
        %v473 = vld [vmem:[#allocation5 + $0x288] sm:$0xf]
        %v474 = vld [vmem:[#allocation5 + $0x28c] sm:$0xf]
        %v475 = vld [vmem:[#allocation5 + $0x290] sm:$0xf]
        %v476 = vld [vmem:[#allocation5 + $0x294] sm:$0xf]
        %v477 = vld [vmem:[#allocation5 + $0x298] sm:$0xf]
        %v478 = vld [vmem:[#allocation5 + $0x29c] sm:$0xf]
        %v479 = vld [vmem:[#allocation5 + $0x2a0] sm:$0xf]
        %v480 = vld [vmem:[#allocation5 + $0x2a4] sm:$0xf]
        %v481 = vld [vmem:[#allocation5 + $0x2a8] sm:$0xf]
        %v482 = vld [vmem:[#allocation5 + $0x2ac] sm:$0xf]
        %v483 = vld [vmem:[#allocation5 + $0x2b0] sm:$0xf]
        %v484 = vld [vmem:[#allocation5 + $0x2b4] sm:$0xf]
        %v485 = vld [vmem:[#allocation5 + $0x2b8] sm:$0xf]
        %v486 = vld [vmem:[#allocation5 + $0x2bc] sm:$0xf]
        %v487 = vld [vmem:[#allocation5 + $0x2c0] sm:$0xf]
        %v488 = vld [vmem:[#allocation5 + $0x2c4] sm:$0xf]
        %v489 = vld [vmem:[#allocation5 + $0x2c8] sm:$0xf]
        %v490 = vld [vmem:[#allocation5 + $0x2cc] sm:$0xf]
        %v491 = vld [vmem:[#allocation5 + $0x2d0] sm:$0xf]
        %v492 = vld [vmem:[#allocation5 + $0x2d4] sm:$0xf]
        %v493 = vld [vmem:[#allocation5 + $0x2d8] sm:$0xf]
        %v494 = vld [vmem:[#allocation5 + $0x2dc] sm:$0xf]
        %v495 = vld [vmem:[#allocation5 + $0x2e0] sm:$0xf]
        %v496 = vld [vmem:[#allocation5 + $0x2e4] sm:$0xf]
        %v497 = vld [vmem:[#allocation5 + $0x2e8] sm:$0xf]
        %v498 = vld [vmem:[#allocation5 + $0x2ec] sm:$0xf]
        %v499 = vld [vmem:[#allocation5 + $0x2f0] sm:$0xf]
        %v500 = vld [vmem:[#allocation5 + $0x2f4] sm:$0xf]
        %v501 = vld [vmem:[#allocation5 + $0x2f8] sm:$0xf]
        %v502 = vld [vmem:[#allocation5 + $0x2fc] sm:$0xf]
        %v503 = vld [vmem:[#allocation5 + $0x300] sm:$0xf]
        %v504 = vld [vmem:[#allocation5 + $0x304] sm:$0xf]
        %v505 = vld [vmem:[#allocation5 + $0x308] sm:$0xf]
        %v506 = vld [vmem:[#allocation5 + $0x30c] sm:$0xf]
        %v507 = vld [vmem:[#allocation5 + $0x310] sm:$0xf]
        %v508 = vld [vmem:[#allocation5 + $0x314] sm:$0xf]
        %v509 = vld [vmem:[#allocation5 + $0x318] sm:$0xf]
        %v510 = vld [vmem:[#allocation5 + $0x31c] sm:$0xf]
        %v511 = vld [vmem:[#allocation5 + $0x320] sm:$0xf]
        %v512 = vld [vmem:[#allocation5 + $0x324] sm:$0xf]
        %v513 = vld [vmem:[#allocation5 + $0x328] sm:$0xf]
        %v514 = vld [vmem:[#allocation5 + $0x32c] sm:$0xf]
        %v515 = vld [vmem:[#allocation5 + $0x330] sm:$0xf]
        %v516 = vld [vmem:[#allocation5 + $0x334] sm:$0xf]
        %v517 = vld [vmem:[#allocation5 + $0x338] sm:$0xf]
        %v518 = vld [vmem:[#allocation5 + $0x33c] sm:$0xf]
        %v519 = vld [vmem:[#allocation5 + $0x340] sm:$0xf]
        %v520 = vld [vmem:[#allocation5 + $0x344] sm:$0xf]
        %v521 = vld [vmem:[#allocation5 + $0x348] sm:$0xf]
        %v522 = vld [vmem:[#allocation5 + $0x34c] sm:$0xf]
        %v523 = vld [vmem:[#allocation5 + $0x350] sm:$0xf]
        %v524 = vld [vmem:[#allocation5 + $0x354] sm:$0xf]
        %v525 = vld [vmem:[#allocation5 + $0x358] sm:$0xf]
        %v526 = vld [vmem:[#allocation5 + $0x35c] sm:$0xf]
        %v527 = vld [vmem:[#allocation5 + $0x360] sm:$0xf]
        %v528 = vld [vmem:[#allocation5 + $0x364] sm:$0xf]
        %v529 = vld [vmem:[#allocation5 + $0x368] sm:$0xf]
        %v530 = vld [vmem:[#allocation5 + $0x36c] sm:$0xf]
        %v531 = vld [vmem:[#allocation5 + $0x370] sm:$0xf]
        %v532 = vld [vmem:[#allocation5 + $0x374] sm:$0xf]
        %v533 = vld [vmem:[#allocation5 + $0x378] sm:$0xf]
        %v534 = vld [vmem:[#allocation5 + $0x37c] sm:$0xf]
        %v535 = vld [vmem:[#allocation5 + $0x380] sm:$0xf]
        %v536 = vld [vmem:[#allocation5 + $0x384] sm:$0xf]
        %v537 = vld [vmem:[#allocation5 + $0x388] sm:$0xf]
        %v538 = vld [vmem:[#allocation5 + $0x38c] sm:$0xf]
        %v539 = vld [vmem:[#allocation5 + $0x390] sm:$0xf]
        %v540 = vld [vmem:[#allocation5 + $0x394] sm:$0xf]
        %v541 = vld [vmem:[#allocation5 + $0x398] sm:$0xf]
        %v542 = vld [vmem:[#allocation5 + $0x39c] sm:$0xf]
        %v543 = vld [vmem:[#allocation5 + $0x3a0] sm:$0xf]
        %v544 = vld [vmem:[#allocation5 + $0x3a4] sm:$0xf]
        %v545 = vld [vmem:[#allocation5 + $0x3a8] sm:$0xf]
        %v546 = vld [vmem:[#allocation5 + $0x3ac] sm:$0xf]
        %v547 = vld [vmem:[#allocation5 + $0x3b0] sm:$0xf]
        %v548 = vld [vmem:[#allocation5 + $0x3b4] sm:$0xf]
        %v549 = vld [vmem:[#allocation5 + $0x3b8] sm:$0xf]
        %v550 = vld [vmem:[#allocation5 + $0x3bc] sm:$0xf]
        %v551 = vld [vmem:[#allocation5 + $0x3c0] sm:$0xf]
        %v552 = vld [vmem:[#allocation5 + $0x3c4] sm:$0xf]
        %v553 = vld [vmem:[#allocation5 + $0x3c8] sm:$0xf]
        %v554 = vld [vmem:[#allocation5 + $0x3cc] sm:$0xf]
        %v555 = vld [vmem:[#allocation5 + $0x3d0] sm:$0xf]
        %v556 = vld [vmem:[#allocation5 + $0x3d4] sm:$0xf]
        %v557 = vld [vmem:[#allocation5 + $0x3d8] sm:$0xf]
        %v558 = vld [vmem:[#allocation5 + $0x3dc] sm:$0xf]
        %v559 = vld [vmem:[#allocation5 + $0x3e0] sm:$0xf]
        %v560 = vld [vmem:[#allocation5 + $0x3e4] sm:$0xf]
        %v561 = vld [vmem:[#allocation5 + $0x3e8] sm:$0xf]
        %v562 = vld [vmem:[#allocation5 + $0x3ec] sm:$0xf]
        %v563 = vld [vmem:[#allocation5 + $0x3f0] sm:$0xf]
        %v564 = vld [vmem:[#allocation5 + $0x3f4] sm:$0xf]
        %v565 = vld [vmem:[#allocation5 + $0x3f8] sm:$0xf]
        %v566 = vld [vmem:[#allocation5 + $0x3fc] sm:$0xf]
        %v567 = vld [vmem:[#allocation5 + $0x400] sm:$0xf]
        %v568 = vld [vmem:[#allocation5 + $0x404] sm:$0xf]
        %v569 = vld [vmem:[#allocation5 + $0x408] sm:$0xf]
        %v570 = vld [vmem:[#allocation5 + $0x40c] sm:$0xf]
        %v571 = vld [vmem:[#allocation5 + $0x410] sm:$0xf]
        %v572 = vld [vmem:[#allocation5 + $0x414] sm:$0xf]
        %v573 = vld [vmem:[#allocation5 + $0x418] sm:$0xf]
        %v574 = vld [vmem:[#allocation5 + $0x41c] sm:$0xf]
        %v575 = vld [vmem:[#allocation5 + $0x420] sm:$0xf]
        %v576 = vld [vmem:[#allocation5 + $0x424] sm:$0xf]
        %v577 = vld [vmem:[#allocation5 + $0x428] sm:$0xf]
        %v578 = vld [vmem:[#allocation5 + $0x42c] sm:$0xf]
        %v579 = vld [vmem:[#allocation5 + $0x430] sm:$0xf]
        %v580 = vld [vmem:[#allocation5 + $0x434] sm:$0xf]
        %v581 = vld [vmem:[#allocation5 + $0x438] sm:$0xf]
        %v582 = vld [vmem:[#allocation5 + $0x43c] sm:$0xf]
        %v583 = vld [vmem:[#allocation5 + $0x440] sm:$0xf]
        %v584 = vld [vmem:[#allocation5 + $0x444] sm:$0xf]
        %v585 = vld [vmem:[#allocation5 + $0x448] sm:$0xf]
        %v586 = vld [vmem:[#allocation5 + $0x44c] sm:$0xf]
        %v587 = vld [vmem:[#allocation5 + $0x450] sm:$0xf]
        %v588 = vld [vmem:[#allocation5 + $0x454] sm:$0xf]
        %v589 = vld [vmem:[#allocation5 + $0x458] sm:$0xf]
        %v590 = vld [vmem:[#allocation5 + $0x45c] sm:$0xf]
        %v591 = vld [vmem:[#allocation5 + $0x460] sm:$0xf]
        %v592 = vld [vmem:[#allocation5 + $0x464] sm:$0xf]
        %v593 = vld [vmem:[#allocation5 + $0x468] sm:$0xf]
        %v594 = vld [vmem:[#allocation5 + $0x46c] sm:$0xf]
        %v595 = vld [vmem:[#allocation5 + $0x470] sm:$0xf]
        %v596 = vld [vmem:[#allocation5 + $0x474] sm:$0xf]
        %v597 = vld [vmem:[#allocation5 + $0x478] sm:$0xf]
        %v598 = vld [vmem:[#allocation5 + $0x47c] sm:$0xf]
        %v599 = vld [vmem:[#allocation5 + $0x480] sm:$0xf]
        %v600 = vld [vmem:[#allocation5 + $0x484] sm:$0xf]
        %v601 = vld [vmem:[#allocation5 + $0x488] sm:$0xf]
        %v602 = vld [vmem:[#allocation5 + $0x48c] sm:$0xf]
        %v603 = vld [vmem:[#allocation5 + $0x490] sm:$0xf]
        %v604 = vld [vmem:[#allocation5 + $0x494] sm:$0xf]
        %v605 = vld [vmem:[#allocation5 + $0x498] sm:$0xf]
        %v606 = vld [vmem:[#allocation5 + $0x49c] sm:$0xf]
        %v607 = vld [vmem:[#allocation5 + $0x4a0] sm:$0xf]
        %v608 = vld [vmem:[#allocation5 + $0x4a4] sm:$0xf]
        %v609 = vld [vmem:[#allocation5 + $0x4a8] sm:$0xf]
        %v610 = vld [vmem:[#allocation5 + $0x4ac] sm:$0xf]
        %v611 = vld [vmem:[#allocation5 + $0x4b0] sm:$0xf]
        %v612 = vld [vmem:[#allocation5 + $0x4b4] sm:$0xf]
        %v613 = vld [vmem:[#allocation5 + $0x4b8] sm:$0xf]
        %v614 = vld [vmem:[#allocation5 + $0x4bc] sm:$0xf]
        %v615 = vld [vmem:[#allocation5 + $0x4c0] sm:$0xf]
        %v616 = vld [vmem:[#allocation5 + $0x4c4] sm:$0xf]
        %v617 = vld [vmem:[#allocation5 + $0x4c8] sm:$0xf]
        %v618 = vld [vmem:[#allocation5 + $0x4cc] sm:$0xf]
        %v619 = vld [vmem:[#allocation5 + $0x4d0] sm:$0xf]
        %v620 = vld [vmem:[#allocation5 + $0x4d4] sm:$0xf]
        %v621 = vld [vmem:[#allocation5 + $0x4d8] sm:$0xf]
        %v622 = vld [vmem:[#allocation5 + $0x4dc] sm:$0xf]
        %v623 = vld [vmem:[#allocation5 + $0x4e0] sm:$0xf]
        %v624 = vld [vmem:[#allocation5 + $0x4e4] sm:$0xf]
        %v625 = vld [vmem:[#allocation5 + $0x4e8] sm:$0xf]
        %v626 = vld [vmem:[#allocation5 + $0x4ec] sm:$0xf]
        %v627 = vld [vmem:[#allocation5 + $0x4f0] sm:$0xf]
        %v628 = vld [vmem:[#allocation5 + $0x4f4] sm:$0xf]
        %v629 = vld [vmem:[#allocation5 + $0x4f8] sm:$0xf]
        %v630 = vld [vmem:[#allocation5 + $0x4fc] sm:$0xf]
        %v631 = vld [vmem:[#allocation5 + $0x500] sm:$0xf]
        %v632 = vld [vmem:[#allocation5 + $0x504] sm:$0xf]
        %v633 = vld [vmem:[#allocation5 + $0x508] sm:$0xf]
        %v634 = vld [vmem:[#allocation5 + $0x50c] sm:$0xf]
        %v635 = vld [vmem:[#allocation5 + $0x510] sm:$0xf]
        %v636 = vld [vmem:[#allocation5 + $0x514] sm:$0xf]
        %v637 = vld [vmem:[#allocation5 + $0x518] sm:$0xf]
        %v638 = vld [vmem:[#allocation5 + $0x51c] sm:$0xf]
        %v639 = vld [vmem:[#allocation5 + $0x520] sm:$0xf]
        %v640 = vld [vmem:[#allocation5 + $0x524] sm:$0xf]
        %v641 = vld [vmem:[#allocation5 + $0x528] sm:$0xf]
        %v642 = vld [vmem:[#allocation5 + $0x52c] sm:$0xf]
        %v643 = vld [vmem:[#allocation5 + $0x530] sm:$0xf]
        %v644 = vld [vmem:[#allocation5 + $0x534] sm:$0xf]
        %v645 = vld [vmem:[#allocation5 + $0x538] sm:$0xf]
        %v646 = vld [vmem:[#allocation5 + $0x53c] sm:$0xf]
        %v647 = vld [vmem:[#allocation5 + $0x540] sm:$0xf]
        %v648 = vld [vmem:[#allocation5 + $0x544] sm:$0xf]
        %v649 = vld [vmem:[#allocation5 + $0x548] sm:$0xf]
        %v650 = vld [vmem:[#allocation5 + $0x54c] sm:$0xf]
        %v651 = vld [vmem:[#allocation5 + $0x550] sm:$0xf]
        %v652 = vld [vmem:[#allocation5 + $0x554] sm:$0xf]
        %v653 = vld [vmem:[#allocation5 + $0x558] sm:$0xf]
        %v654 = vld [vmem:[#allocation5 + $0x55c] sm:$0xf]
        %v655 = vld [vmem:[#allocation5 + $0x560] sm:$0xf]
        %v656 = vld [vmem:[#allocation5 + $0x564] sm:$0xf]
        %v657 = vld [vmem:[#allocation5 + $0x568] sm:$0xf]
        %v658 = vld [vmem:[#allocation5 + $0x56c] sm:$0xf]
        %v659 = vld [vmem:[#allocation5 + $0x570] sm:$0xf]
        %v660 = vld [vmem:[#allocation5 + $0x574] sm:$0xf]
        %v661 = vld [vmem:[#allocation5 + $0x578] sm:$0xf]
        %v662 = vld [vmem:[#allocation5 + $0x57c] sm:$0xf]
        %v663 = vld [vmem:[#allocation5 + $0x580] sm:$0xf]
        %v664 = vld [vmem:[#allocation5 + $0x584] sm:$0xf]
        %v665 = vld [vmem:[#allocation5 + $0x588] sm:$0xf]
        %v666 = vld [vmem:[#allocation5 + $0x58c] sm:$0xf]
        %v667 = vld [vmem:[#allocation5 + $0x590] sm:$0xf]
        %v668 = vld [vmem:[#allocation5 + $0x594] sm:$0xf]
        %v669 = vld [vmem:[#allocation5 + $0x598] sm:$0xf]
        %v670 = vld [vmem:[#allocation5 + $0x59c] sm:$0xf]
        %v671 = vld [vmem:[#allocation5 + $0x5a0] sm:$0xf]
        %v672 = vld [vmem:[#allocation5 + $0x5a4] sm:$0xf]
        %v673 = vld [vmem:[#allocation5 + $0x5a8] sm:$0xf]
        %v674 = vld [vmem:[#allocation5 + $0x5ac] sm:$0xf]
        %v675 = vld [vmem:[#allocation5 + $0x5b0] sm:$0xf]
        %v676 = vld [vmem:[#allocation5 + $0x5b4] sm:$0xf]
        %v677 = vld [vmem:[#allocation5 + $0x5b8] sm:$0xf]
        %v678 = vld [vmem:[#allocation5 + $0x5bc] sm:$0xf]
        %v679 = vld [vmem:[#allocation5 + $0x5c0] sm:$0xf]
        %v680 = vld [vmem:[#allocation5 + $0x5c4] sm:$0xf]
        %v681 = vld [vmem:[#allocation5 + $0x5c8] sm:$0xf]
        %v682 = vld [vmem:[#allocation5 + $0x5cc] sm:$0xf]
        %v683 = vld [vmem:[#allocation5 + $0x5d0] sm:$0xf]
        %v684 = vld [vmem:[#allocation5 + $0x5d4] sm:$0xf]
        %v685 = vld [vmem:[#allocation5 + $0x5d8] sm:$0xf]
        %v686 = vld [vmem:[#allocation5 + $0x5dc] sm:$0xf]
        %v687 = vld [vmem:[#allocation5 + $0x5e0] sm:$0xf]
        %v688 = vld [vmem:[#allocation5 + $0x5e4] sm:$0xf]
        %v689 = vld [vmem:[#allocation5 + $0x5e8] sm:$0xf]
        %v690 = vld [vmem:[#allocation5 + $0x5ec] sm:$0xf]
        %v691 = vld [vmem:[#allocation5 + $0x5f0] sm:$0xf]
        %v692 = vld [vmem:[#allocation5 + $0x5f4] sm:$0xf]
        %v693 = vld [vmem:[#allocation5 + $0x5f8] sm:$0xf]
        %v694 = vld [vmem:[#allocation5 + $0x5fc] sm:$0xf]
        %v695 = vld [vmem:[#allocation5 + $0x600] sm:$0xf]
        %v696 = vld [vmem:[#allocation5 + $0x604] sm:$0xf]
        %v697 = vld [vmem:[#allocation5 + $0x608] sm:$0xf]
        %v698 = vld [vmem:[#allocation5 + $0x60c] sm:$0xf]
        %v699 = vld [vmem:[#allocation5 + $0x610] sm:$0xf]
        %v700 = vld [vmem:[#allocation5 + $0x614] sm:$0xf]
        %v701 = vld [vmem:[#allocation5 + $0x618] sm:$0xf]
        %v702 = vld [vmem:[#allocation5 + $0x61c] sm:$0xf]
        %v703 = vld [vmem:[#allocation5 + $0x620] sm:$0xf]
        %v704 = vld [vmem:[#allocation5 + $0x624] sm:$0xf]
        %v705 = vld [vmem:[#allocation5 + $0x628] sm:$0xf]
        %v706 = vld [vmem:[#allocation5 + $0x62c] sm:$0xf]
        %v707 = vld [vmem:[#allocation5 + $0x630] sm:$0xf]
        %v708 = vld [vmem:[#allocation5 + $0x634] sm:$0xf]
        %v709 = vld [vmem:[#allocation5 + $0x638] sm:$0xf]
        %v710 = vld [vmem:[#allocation5 + $0x63c] sm:$0xf]
        %v711 = vld [vmem:[#allocation5 + $0x640] sm:$0xf]
        %v712 = vld [vmem:[#allocation5 + $0x644] sm:$0xf]
        %v713 = vld [vmem:[#allocation5 + $0x648] sm:$0xf]
        %v714 = vld [vmem:[#allocation5 + $0x64c] sm:$0xf]
        %v715 = vld [vmem:[#allocation5 + $0x650] sm:$0xf]
        %v716 = vld [vmem:[#allocation5 + $0x654] sm:$0xf]
        %v717 = vld [vmem:[#allocation5 + $0x658] sm:$0xf]
        %v718 = vld [vmem:[#allocation5 + $0x65c] sm:$0xf]
        %v719 = vld [vmem:[#allocation5 + $0x660] sm:$0xf]
        %v720 = vld [vmem:[#allocation5 + $0x664] sm:$0xf]
        %v721 = vld [vmem:[#allocation5 + $0x668] sm:$0xf]
        %v722 = vld [vmem:[#allocation5 + $0x66c] sm:$0xf]
        %v723 = vld [vmem:[#allocation5 + $0x670] sm:$0xf]
        %v724 = vld [vmem:[#allocation5 + $0x674] sm:$0xf]
        %v725 = vld [vmem:[#allocation5 + $0x678] sm:$0xf]
        %v726 = vld [vmem:[#allocation5 + $0x67c] sm:$0xf]
        %v727 = vld [vmem:[#allocation5 + $0x680] sm:$0xf]
        %v728 = vld [vmem:[#allocation5 + $0x684] sm:$0xf]
        %v729 = vld [vmem:[#allocation5 + $0x688] sm:$0xf]
        %v730 = vld [vmem:[#allocation5 + $0x68c] sm:$0xf]
        %v731 = vld [vmem:[#allocation5 + $0x690] sm:$0xf]
        %v732 = vld [vmem:[#allocation5 + $0x694] sm:$0xf]
        %v733 = vld [vmem:[#allocation5 + $0x698] sm:$0xf]
        %v734 = vld [vmem:[#allocation5 + $0x69c] sm:$0xf]
        %v735 = vld [vmem:[#allocation5 + $0x6a0] sm:$0xf]
        %v736 = vld [vmem:[#allocation5 + $0x6a4] sm:$0xf]
        %v737 = vld [vmem:[#allocation5 + $0x6a8] sm:$0xf]
        %v738 = vld [vmem:[#allocation5 + $0x6ac] sm:$0xf]
        %v739 = vld [vmem:[#allocation5 + $0x6b0] sm:$0xf]
        %v740 = vld [vmem:[#allocation5 + $0x6b4] sm:$0xf]
        %v741 = vld [vmem:[#allocation5 + $0x6b8] sm:$0xf]
        %v742 = vld [vmem:[#allocation5 + $0x6bc] sm:$0xf]
        %v743 = vld [vmem:[#allocation5 + $0x6c0] sm:$0xf]
        %v744 = vld [vmem:[#allocation5 + $0x6c4] sm:$0xf]
        %v745 = vld [vmem:[#allocation5 + $0x6c8] sm:$0xf]
        %v746 = vld [vmem:[#allocation5 + $0x6cc] sm:$0xf]
        %v747 = vld [vmem:[#allocation5 + $0x6d0] sm:$0xf]
        %v748 = vld [vmem:[#allocation5 + $0x6d4] sm:$0xf]
        %v749 = vld [vmem:[#allocation5 + $0x6d8] sm:$0xf]
        %v750 = vld [vmem:[#allocation5 + $0x6dc] sm:$0xf]
        %v751 = vld [vmem:[#allocation5 + $0x6e0] sm:$0xf]
        %v752 = vld [vmem:[#allocation5 + $0x6e4] sm:$0xf]
        %v753 = vld [vmem:[#allocation5 + $0x6e8] sm:$0xf]
        %v754 = vld [vmem:[#allocation5 + $0x6ec] sm:$0xf]
        %v755 = vld [vmem:[#allocation5 + $0x6f0] sm:$0xf]
        %v756 = vld [vmem:[#allocation5 + $0x6f4] sm:$0xf]
        %v757 = vld [vmem:[#allocation5 + $0x6f8] sm:$0xf]
        %v758 = vld [vmem:[#allocation5 + $0x6fc] sm:$0xf]
        %v759 = vld [vmem:[#allocation5 + $0x700] sm:$0xf]
        %v760 = vld [vmem:[#allocation5 + $0x704] sm:$0xf]
        %v761 = vld [vmem:[#allocation5 + $0x708] sm:$0xf]
        %v762 = vld [vmem:[#allocation5 + $0x70c] sm:$0xf]
        %v763 = vld [vmem:[#allocation5 + $0x710] sm:$0xf]
        %v764 = vld [vmem:[#allocation5 + $0x714] sm:$0xf]
        %v765 = vld [vmem:[#allocation5 + $0x718] sm:$0xf]
        %v766 = vld [vmem:[#allocation5 + $0x71c] sm:$0xf]
        %v767 = vld [vmem:[#allocation5 + $0x720] sm:$0xf]
        %v768 = vld [vmem:[#allocation5 + $0x724] sm:$0xf]
        %v769 = vld [vmem:[#allocation5 + $0x728] sm:$0xf]
        %v770 = vld [vmem:[#allocation5 + $0x72c] sm:$0xf]
        %v771 = vld [vmem:[#allocation5 + $0x730] sm:$0xf]
        %v772 = vld [vmem:[#allocation5 + $0x734] sm:$0xf]
        %v773 = vld [vmem:[#allocation5 + $0x738] sm:$0xf]
        %v774 = vld [vmem:[#allocation5 + $0x73c] sm:$0xf]
        %v775 = vld [vmem:[#allocation5 + $0x740] sm:$0xf]
        %v776 = vld [vmem:[#allocation5 + $0x744] sm:$0xf]
        %v777 = vld [vmem:[#allocation5 + $0x748] sm:$0xf]
        %v778 = vld [vmem:[#allocation5 + $0x74c] sm:$0xf]
        %v779 = vld [vmem:[#allocation5 + $0x750] sm:$0xf]
        %v780 = vld [vmem:[#allocation5 + $0x754] sm:$0xf]
        %v781 = vld [vmem:[#allocation5 + $0x758] sm:$0xf]
        %v782 = vld [vmem:[#allocation5 + $0x75c] sm:$0xf]
        %v783 = vld [vmem:[#allocation5 + $0x760] sm:$0xf]
        %v784 = vld [vmem:[#allocation5 + $0x764] sm:$0xf]
        %v785 = vld [vmem:[#allocation5 + $0x768] sm:$0xf]
        %v786 = vld [vmem:[#allocation5 + $0x76c] sm:$0xf]
        %v787 = vld [vmem:[#allocation5 + $0x770] sm:$0xf]
        %v788 = vld [vmem:[#allocation5 + $0x774] sm:$0xf]
        %v789 = vld [vmem:[#allocation5 + $0x778] sm:$0xf]
        %v790 = vld [vmem:[#allocation5 + $0x77c] sm:$0xf]
        %v791 = vld [vmem:[#allocation5 + $0x780] sm:$0xf]
        %v792 = vld [vmem:[#allocation5 + $0x784] sm:$0xf]
        %v793 = vld [vmem:[#allocation5 + $0x788] sm:$0xf]
        %v794 = vld [vmem:[#allocation5 + $0x78c] sm:$0xf]
        %v795 = vld [vmem:[#allocation5 + $0x790] sm:$0xf]
        %v796 = vld [vmem:[#allocation5 + $0x794] sm:$0xf]
        %v797 = vld [vmem:[#allocation5 + $0x798] sm:$0xf]
        %v798 = vld [vmem:[#allocation5 + $0x79c] sm:$0xf]
        %v799 = vld [vmem:[#allocation5 + $0x7a0] sm:$0xf]
        %v800 = vld [vmem:[#allocation5 + $0x7a4] sm:$0xf]
        %v801 = vld [vmem:[#allocation5 + $0x7a8] sm:$0xf]
        %v802 = vld [vmem:[#allocation5 + $0x7ac] sm:$0xf]
        %v803 = vld [vmem:[#allocation5 + $0x7b0] sm:$0xf]
        %v804 = vld [vmem:[#allocation5 + $0x7b4] sm:$0xf]
        %v805 = vld [vmem:[#allocation5 + $0x7b8] sm:$0xf]
        %v806 = vld [vmem:[#allocation5 + $0x7bc] sm:$0xf]
        %v807 = vld [vmem:[#allocation5 + $0x7c0] sm:$0xf]
        %v808 = vld [vmem:[#allocation5 + $0x7c4] sm:$0xf]
        %v809 = vld [vmem:[#allocation5 + $0x7c8] sm:$0xf]
        %v810 = vld [vmem:[#allocation5 + $0x7cc] sm:$0xf]
        %v811 = vld [vmem:[#allocation5 + $0x7d0] sm:$0xf]
        %v812 = vld [vmem:[#allocation5 + $0x7d4] sm:$0xf]
        %v813 = vld [vmem:[#allocation5 + $0x7d8] sm:$0xf]
        %v814 = vld [vmem:[#allocation5 + $0x7dc] sm:$0xf]
        %v815 = vld [vmem:[#allocation5 + $0x7e0] sm:$0xf]
        %v816 = vld [vmem:[#allocation5 + $0x7e4] sm:$0xf]
        %v817 = vld [vmem:[#allocation5 + $0x7e8] sm:$0xf]
        %v818 = vld [vmem:[#allocation5 + $0x7ec] sm:$0xf]
        %v819 = vld [vmem:[#allocation5 + $0x7f0] sm:$0xf]
        %v820 = vld [vmem:[#allocation5 + $0x7f4] sm:$0xf]
        %v821 = vld [vmem:[#allocation5 + $0x7f8] sm:$0xf]
        %v822 = vld [vmem:[#allocation5 + $0x7fc] sm:$0xf]
        %v823 = vld [vmem:[%s2] sm:$0x1]
        %v825 = vlaneseq
        %v826 = vshrl.u32 %v825, 7
        %v827 = vsub.s32 0, %v826
        %v828 = vrot.slane %v823, %v827
        %v846 = vunpack.c.l.b16 %v295
        %v847 = vunpack.c.h.b16 %v295
        %v848 = vunpack.c.l.b16 %v296
        %v849 = vunpack.c.h.b16 %v296
        %v850 = vunpack.c.l.b16 %v297
        %v851 = vunpack.c.h.b16 %v297
        %v852 = vunpack.c.l.b16 %v298
        %v853 = vunpack.c.h.b16 %v298
        %v854 = vunpack.c.l.b16 %v299
        %v855 = vunpack.c.h.b16 %v299
        %v856 = vunpack.c.l.b16 %v300
        %v857 = vunpack.c.h.b16 %v300
        %v858 = vunpack.c.l.b16 %v301
        %v859 = vunpack.c.h.b16 %v301
        %v860 = vunpack.c.l.b16 %v302
        %v861 = vunpack.c.h.b16 %v302
        %v862 = vunpack.c.l.b16 %v303
        %v863 = vunpack.c.h.b16 %v303
        %v864 = vunpack.c.l.b16 %v304
        %v865 = vunpack.c.h.b16 %v304
        %v866 = vunpack.c.l.b16 %v305
        %v867 = vunpack.c.h.b16 %v305
        %v868 = vunpack.c.l.b16 %v306
        %v869 = vunpack.c.h.b16 %v306
        %v870 = vunpack.c.l.b16 %v307
        %v871 = vunpack.c.h.b16 %v307
        %v872 = vunpack.c.l.b16 %v308
        %v873 = vunpack.c.h.b16 %v308
        %v874 = vunpack.c.l.b16 %v309
        %v875 = vunpack.c.h.b16 %v309
        %v876 = vunpack.c.l.b16 %v310
        %v877 = vunpack.c.h.b16 %v310
        %v878 = vpack.c.b16 %v846, %v846
        %v879 = vpack.c.b16 %v847, %v847
        %v880 = vpack.c.b16 %v848, %v848
        %v881 = vpack.c.b16 %v849, %v849
        %v882 = vpack.c.b16 %v850, %v850
        %v883 = vpack.c.b16 %v851, %v851
        %v884 = vpack.c.b16 %v852, %v852
        %v885 = vpack.c.b16 %v853, %v853
        %v886 = vpack.c.b16 %v854, %v854
        %v887 = vpack.c.b16 %v855, %v855
        %v888 = vpack.c.b16 %v856, %v856
        %v889 = vpack.c.b16 %v857, %v857
        %v890 = vpack.c.b16 %v858, %v858
        %v891 = vpack.c.b16 %v859, %v859
        %v892 = vpack.c.b16 %v860, %v860
        %v893 = vpack.c.b16 %v861, %v861
        %v894 = vpack.c.b16 %v862, %v862
        %v895 = vpack.c.b16 %v863, %v863
        %v896 = vpack.c.b16 %v864, %v864
        %v897 = vpack.c.b16 %v865, %v865
        %v898 = vpack.c.b16 %v866, %v866
        %v899 = vpack.c.b16 %v867, %v867
        %v900 = vpack.c.b16 %v868, %v868
        %v901 = vpack.c.b16 %v869, %v869
        %v902 = vpack.c.b16 %v870, %v870
        %v903 = vpack.c.b16 %v871, %v871
        %v904 = vpack.c.b16 %v872, %v872
        %v905 = vpack.c.b16 %v873, %v873
        %v906 = vpack.c.b16 %v874, %v874
        %v907 = vpack.c.b16 %v875, %v875
        %v908 = vpack.c.b16 %v876, %v876
        %v909 = vpack.c.b16 %v877, %v877
        %v1454 = vunpack.c.l.b16 %v311
        %v1455 = vunpack.c.l.b16 %v312
        %v1456 = vunpack.c.l.b16 %v313
        %v1457 = vunpack.c.l.b16 %v314
        %v1458 = vunpack.c.l.b16 %v315
        %v1459 = vunpack.c.l.b16 %v316
        %v1460 = vunpack.c.l.b16 %v317
        %v1461 = vunpack.c.l.b16 %v318
        %v1462 = vunpack.c.l.b16 %v319
        %v1463 = vunpack.c.l.b16 %v320
        %v1464 = vunpack.c.l.b16 %v321
        %v1465 = vunpack.c.l.b16 %v322
        %v1466 = vunpack.c.l.b16 %v323
        %v1467 = vunpack.c.l.b16 %v324
        %v1468 = vunpack.c.l.b16 %v325
        %v1469 = vunpack.c.l.b16 %v326
        %v1470 = vunpack.c.l.b16 %v327
        %v1471 = vunpack.c.l.b16 %v328
        %v1472 = vunpack.c.l.b16 %v329
        %v1473 = vunpack.c.l.b16 %v330
        %v1474 = vunpack.c.l.b16 %v331
        %v1475 = vunpack.c.l.b16 %v332
        %v1476 = vunpack.c.l.b16 %v333
        %v1477 = vunpack.c.l.b16 %v334
        %v1478 = vunpack.c.l.b16 %v335
        %v1479 = vunpack.c.l.b16 %v336
        %v1480 = vunpack.c.l.b16 %v337
        %v1481 = vunpack.c.l.b16 %v338
        %v1482 = vunpack.c.l.b16 %v339
        %v1483 = vunpack.c.l.b16 %v340
        %v1484 = vunpack.c.l.b16 %v341
        %v1485 = vunpack.c.l.b16 %v342
        %v1486 = vunpack.c.l.b16 %v343
        %v1487 = vunpack.c.l.b16 %v344
        %v1488 = vunpack.c.l.b16 %v345
        %v1489 = vunpack.c.l.b16 %v346
        %v1490 = vunpack.c.l.b16 %v347
        %v1491 = vunpack.c.l.b16 %v348
        %v1492 = vunpack.c.l.b16 %v349
        %v1493 = vunpack.c.l.b16 %v350
        %v1494 = vunpack.c.l.b16 %v351
        %v1495 = vunpack.c.l.b16 %v352
        %v1496 = vunpack.c.l.b16 %v353
        %v1497 = vunpack.c.l.b16 %v354
        %v1498 = vunpack.c.l.b16 %v355
        %v1499 = vunpack.c.l.b16 %v356
        %v1500 = vunpack.c.l.b16 %v357
        %v1501 = vunpack.c.l.b16 %v358
        %v1502 = vunpack.c.l.b16 %v359
        %v1503 = vunpack.c.l.b16 %v360
        %v1504 = vunpack.c.l.b16 %v361
        %v1505 = vunpack.c.l.b16 %v362
        %v1506 = vunpack.c.l.b16 %v363
        %v1507 = vunpack.c.l.b16 %v364
        %v1508 = vunpack.c.l.b16 %v365
        %v1509 = vunpack.c.l.b16 %v366
        %v1510 = vunpack.c.l.b16 %v367
        %v1511 = vunpack.c.l.b16 %v368
        %v1512 = vunpack.c.l.b16 %v369
        %v1513 = vunpack.c.l.b16 %v370
        %v1514 = vunpack.c.l.b16 %v371
        %v1515 = vunpack.c.l.b16 %v372
        %v1516 = vunpack.c.l.b16 %v373
        %v1517 = vunpack.c.l.b16 %v374
        %v1518 = vunpack.c.l.b16 %v375
        %v1519 = vunpack.c.l.b16 %v376
        %v1520 = vunpack.c.l.b16 %v377
        %v1521 = vunpack.c.l.b16 %v378
        %v1522 = vunpack.c.l.b16 %v379
        %v1523 = vunpack.c.l.b16 %v380
        %v1524 = vunpack.c.l.b16 %v381
        %v1525 = vunpack.c.l.b16 %v382
        %v1526 = vunpack.c.l.b16 %v383
        %v1527 = vunpack.c.l.b16 %v384
        %v1528 = vunpack.c.l.b16 %v385
        %v1529 = vunpack.c.l.b16 %v386
        %v1530 = vunpack.c.l.b16 %v387
        %v1531 = vunpack.c.l.b16 %v388
        %v1532 = vunpack.c.l.b16 %v389
        %v1533 = vunpack.c.l.b16 %v390
        %v1534 = vunpack.c.l.b16 %v391
        %v1535 = vunpack.c.l.b16 %v392
        %v1536 = vunpack.c.l.b16 %v393
        %v1537 = vunpack.c.l.b16 %v394
        %v1538 = vunpack.c.l.b16 %v395
        %v1539 = vunpack.c.l.b16 %v396
        %v1540 = vunpack.c.l.b16 %v397
        %v1541 = vunpack.c.l.b16 %v398
        %v1542 = vunpack.c.l.b16 %v399
        %v1543 = vunpack.c.l.b16 %v400
        %v1544 = vunpack.c.l.b16 %v401
        %v1545 = vunpack.c.l.b16 %v402
        %v1546 = vunpack.c.l.b16 %v403
        %v1547 = vunpack.c.l.b16 %v404
        %v1548 = vunpack.c.l.b16 %v405
        %v1549 = vunpack.c.l.b16 %v406
        %v1550 = vunpack.c.l.b16 %v407
        %v1551 = vunpack.c.l.b16 %v408
        %v1552 = vunpack.c.l.b16 %v409
        %v1553 = vunpack.c.l.b16 %v410
        %v1554 = vunpack.c.l.b16 %v411
        %v1555 = vunpack.c.l.b16 %v412
        %v1556 = vunpack.c.l.b16 %v413
        %v1557 = vunpack.c.l.b16 %v414
        %v1558 = vunpack.c.l.b16 %v415
        %v1559 = vunpack.c.l.b16 %v416
        %v1560 = vunpack.c.l.b16 %v417
        %v1561 = vunpack.c.l.b16 %v418
        %v1562 = vunpack.c.l.b16 %v419
        %v1563 = vunpack.c.l.b16 %v420
        %v1564 = vunpack.c.l.b16 %v421
        %v1565 = vunpack.c.l.b16 %v422
        %v1566 = vunpack.c.l.b16 %v423
        %v1567 = vunpack.c.l.b16 %v424
        %v1568 = vunpack.c.l.b16 %v425
        %v1569 = vunpack.c.l.b16 %v426
        %v1570 = vunpack.c.l.b16 %v427
        %v1571 = vunpack.c.l.b16 %v428
        %v1572 = vunpack.c.l.b16 %v429
        %v1573 = vunpack.c.l.b16 %v430
        %v1574 = vunpack.c.l.b16 %v431
        %v1575 = vunpack.c.l.b16 %v432
        %v1576 = vunpack.c.l.b16 %v433
        %v1577 = vunpack.c.l.b16 %v434
        %v1578 = vunpack.c.l.b16 %v435
        %v1579 = vunpack.c.l.b16 %v436
        %v1580 = vunpack.c.l.b16 %v437
        %v1581 = vunpack.c.l.b16 %v438
        %v1582 = vunpack.c.l.b16 %v439
        %v1583 = vunpack.c.l.b16 %v440
        %v1584 = vunpack.c.l.b16 %v441
        %v1585 = vunpack.c.l.b16 %v442
        %v1586 = vunpack.c.l.b16 %v443
        %v1587 = vunpack.c.l.b16 %v444
        %v1588 = vunpack.c.l.b16 %v445
        %v1589 = vunpack.c.l.b16 %v446
        %v1590 = vunpack.c.l.b16 %v447
        %v1591 = vunpack.c.l.b16 %v448
        %v1592 = vunpack.c.l.b16 %v449
        %v1593 = vunpack.c.l.b16 %v450
        %v1594 = vunpack.c.l.b16 %v451
        %v1595 = vunpack.c.l.b16 %v452
        %v1596 = vunpack.c.l.b16 %v453
        %v1597 = vunpack.c.l.b16 %v454
        %v1598 = vunpack.c.l.b16 %v455
        %v1599 = vunpack.c.l.b16 %v456
        %v1600 = vunpack.c.l.b16 %v457
        %v1601 = vunpack.c.l.b16 %v458
        %v1602 = vunpack.c.l.b16 %v459
        %v1603 = vunpack.c.l.b16 %v460
        %v1604 = vunpack.c.l.b16 %v461
        %v1605 = vunpack.c.l.b16 %v462
        %v1606 = vunpack.c.l.b16 %v463
        %v1607 = vunpack.c.l.b16 %v464
        %v1608 = vunpack.c.l.b16 %v465
        %v1609 = vunpack.c.l.b16 %v466
        %v1610 = vunpack.c.l.b16 %v467
        %v1611 = vunpack.c.l.b16 %v468
        %v1612 = vunpack.c.l.b16 %v469
        %v1613 = vunpack.c.l.b16 %v470
        %v1614 = vunpack.c.l.b16 %v471
        %v1615 = vunpack.c.l.b16 %v472
        %v1616 = vunpack.c.l.b16 %v473
        %v1617 = vunpack.c.l.b16 %v474
        %v1618 = vunpack.c.l.b16 %v475
        %v1619 = vunpack.c.l.b16 %v476
        %v1620 = vunpack.c.l.b16 %v477
        %v1621 = vunpack.c.l.b16 %v478
        %v1622 = vunpack.c.l.b16 %v479
        %v1623 = vunpack.c.l.b16 %v480
        %v1624 = vunpack.c.l.b16 %v481
        %v1625 = vunpack.c.l.b16 %v482
        %v1626 = vunpack.c.l.b16 %v483
        %v1627 = vunpack.c.l.b16 %v484
        %v1628 = vunpack.c.l.b16 %v485
        %v1629 = vunpack.c.l.b16 %v486
        %v1630 = vunpack.c.l.b16 %v487
        %v1631 = vunpack.c.l.b16 %v488
        %v1632 = vunpack.c.l.b16 %v489
        %v1633 = vunpack.c.l.b16 %v490
        %v1634 = vunpack.c.l.b16 %v491
        %v1635 = vunpack.c.l.b16 %v492
        %v1636 = vunpack.c.l.b16 %v493
        %v1637 = vunpack.c.l.b16 %v494
        %v1638 = vunpack.c.l.b16 %v495
        %v1639 = vunpack.c.l.b16 %v496
        %v1640 = vunpack.c.l.b16 %v497
        %v1641 = vunpack.c.l.b16 %v498
        %v1642 = vunpack.c.l.b16 %v499
        %v1643 = vunpack.c.l.b16 %v500
        %v1644 = vunpack.c.l.b16 %v501
        %v1645 = vunpack.c.l.b16 %v502
        %v1646 = vunpack.c.l.b16 %v503
        %v1647 = vunpack.c.l.b16 %v504
        %v1648 = vunpack.c.l.b16 %v505
        %v1649 = vunpack.c.l.b16 %v506
        %v1650 = vunpack.c.l.b16 %v507
        %v1651 = vunpack.c.l.b16 %v508
        %v1652 = vunpack.c.l.b16 %v509
        %v1653 = vunpack.c.l.b16 %v510
        %v1654 = vunpack.c.l.b16 %v511
        %v1655 = vunpack.c.l.b16 %v512
        %v1656 = vunpack.c.l.b16 %v513
        %v1657 = vunpack.c.l.b16 %v514
        %v1658 = vunpack.c.l.b16 %v515
        %v1659 = vunpack.c.l.b16 %v516
        %v1660 = vunpack.c.l.b16 %v517
        %v1661 = vunpack.c.l.b16 %v518
        %v1662 = vunpack.c.l.b16 %v519
        %v1663 = vunpack.c.l.b16 %v520
        %v1664 = vunpack.c.l.b16 %v521
        %v1665 = vunpack.c.l.b16 %v522
        %v1666 = vunpack.c.l.b16 %v523
        %v1667 = vunpack.c.l.b16 %v524
        %v1668 = vunpack.c.l.b16 %v525
        %v1669 = vunpack.c.l.b16 %v526
        %v1670 = vunpack.c.l.b16 %v527
        %v1671 = vunpack.c.l.b16 %v528
        %v1672 = vunpack.c.l.b16 %v529
        %v1673 = vunpack.c.l.b16 %v530
        %v1674 = vunpack.c.l.b16 %v531
        %v1675 = vunpack.c.l.b16 %v532
        %v1676 = vunpack.c.l.b16 %v533
        %v1677 = vunpack.c.l.b16 %v534
        %v1678 = vunpack.c.l.b16 %v535
        %v1679 = vunpack.c.l.b16 %v536
        %v1680 = vunpack.c.l.b16 %v537
        %v1681 = vunpack.c.l.b16 %v538
        %v1682 = vunpack.c.l.b16 %v539
        %v1683 = vunpack.c.l.b16 %v540
        %v1684 = vunpack.c.l.b16 %v541
        %v1685 = vunpack.c.l.b16 %v542
        %v1686 = vunpack.c.l.b16 %v543
        %v1687 = vunpack.c.l.b16 %v544
        %v1688 = vunpack.c.l.b16 %v545
        %v1689 = vunpack.c.l.b16 %v546
        %v1690 = vunpack.c.l.b16 %v547
        %v1691 = vunpack.c.l.b16 %v548
        %v1692 = vunpack.c.l.b16 %v549
        %v1693 = vunpack.c.l.b16 %v550
        %v1694 = vunpack.c.l.b16 %v551
        %v1695 = vunpack.c.l.b16 %v552
        %v1696 = vunpack.c.l.b16 %v553
        %v1697 = vunpack.c.l.b16 %v554
        %v1698 = vunpack.c.l.b16 %v555
        %v1699 = vunpack.c.l.b16 %v556
        %v1700 = vunpack.c.l.b16 %v557
        %v1701 = vunpack.c.l.b16 %v558
        %v1702 = vunpack.c.l.b16 %v559
        %v1703 = vunpack.c.l.b16 %v560
        %v1704 = vunpack.c.l.b16 %v561
        %v1705 = vunpack.c.l.b16 %v562
        %v1706 = vunpack.c.l.b16 %v563
        %v1707 = vunpack.c.l.b16 %v564
        %v1708 = vunpack.c.l.b16 %v565
        %v1709 = vunpack.c.l.b16 %v566
        %v1710 = vunpack.c.l.b16 %v567
        %v1711 = vunpack.c.l.b16 %v568
        %v1712 = vunpack.c.l.b16 %v569
        %v1713 = vunpack.c.l.b16 %v570
        %v1714 = vunpack.c.l.b16 %v571
        %v1715 = vunpack.c.l.b16 %v572
        %v1716 = vunpack.c.l.b16 %v573
        %v1717 = vunpack.c.l.b16 %v574
        %v1718 = vunpack.c.l.b16 %v575
        %v1719 = vunpack.c.l.b16 %v576
        %v1720 = vunpack.c.l.b16 %v577
        %v1721 = vunpack.c.l.b16 %v578
        %v1722 = vunpack.c.l.b16 %v579
        %v1723 = vunpack.c.l.b16 %v580
        %v1724 = vunpack.c.l.b16 %v581
        %v1725 = vunpack.c.l.b16 %v582
        %v1726 = vunpack.c.l.b16 %v583
        %v1727 = vunpack.c.l.b16 %v584
        %v1728 = vunpack.c.l.b16 %v585
        %v1729 = vunpack.c.l.b16 %v586
        %v1730 = vunpack.c.l.b16 %v587
        %v1731 = vunpack.c.l.b16 %v588
        %v1732 = vunpack.c.l.b16 %v589
        %v1733 = vunpack.c.l.b16 %v590
        %v1734 = vunpack.c.l.b16 %v591
        %v1735 = vunpack.c.l.b16 %v592
        %v1736 = vunpack.c.l.b16 %v593
        %v1737 = vunpack.c.l.b16 %v594
        %v1738 = vunpack.c.l.b16 %v595
        %v1739 = vunpack.c.l.b16 %v596
        %v1740 = vunpack.c.l.b16 %v597
        %v1741 = vunpack.c.l.b16 %v598
        %v1742 = vunpack.c.l.b16 %v599
        %v1743 = vunpack.c.l.b16 %v600
        %v1744 = vunpack.c.l.b16 %v601
        %v1745 = vunpack.c.l.b16 %v602
        %v1746 = vunpack.c.l.b16 %v603
        %v1747 = vunpack.c.l.b16 %v604
        %v1748 = vunpack.c.l.b16 %v605
        %v1749 = vunpack.c.l.b16 %v606
        %v1750 = vunpack.c.l.b16 %v607
        %v1751 = vunpack.c.l.b16 %v608
        %v1752 = vunpack.c.l.b16 %v609
        %v1753 = vunpack.c.l.b16 %v610
        %v1754 = vunpack.c.l.b16 %v611
        %v1755 = vunpack.c.l.b16 %v612
        %v1756 = vunpack.c.l.b16 %v613
        %v1757 = vunpack.c.l.b16 %v614
        %v1758 = vunpack.c.l.b16 %v615
        %v1759 = vunpack.c.l.b16 %v616
        %v1760 = vunpack.c.l.b16 %v617
        %v1761 = vunpack.c.l.b16 %v618
        %v1762 = vunpack.c.l.b16 %v619
        %v1763 = vunpack.c.l.b16 %v620
        %v1764 = vunpack.c.l.b16 %v621
        %v1765 = vunpack.c.l.b16 %v622
        %v1766 = vunpack.c.l.b16 %v623
        %v1767 = vunpack.c.l.b16 %v624
        %v1768 = vunpack.c.l.b16 %v625
        %v1769 = vunpack.c.l.b16 %v626
        %v1770 = vunpack.c.l.b16 %v627
        %v1771 = vunpack.c.l.b16 %v628
        %v1772 = vunpack.c.l.b16 %v629
        %v1773 = vunpack.c.l.b16 %v630
        %v1774 = vunpack.c.l.b16 %v631
        %v1775 = vunpack.c.l.b16 %v632
        %v1776 = vunpack.c.l.b16 %v633
        %v1777 = vunpack.c.l.b16 %v634
        %v1778 = vunpack.c.l.b16 %v635
        %v1779 = vunpack.c.l.b16 %v636
        %v1780 = vunpack.c.l.b16 %v637
        %v1781 = vunpack.c.l.b16 %v638
        %v1782 = vunpack.c.l.b16 %v639
        %v1783 = vunpack.c.l.b16 %v640
        %v1784 = vunpack.c.l.b16 %v641
        %v1785 = vunpack.c.l.b16 %v642
        %v1786 = vunpack.c.l.b16 %v643
        %v1787 = vunpack.c.l.b16 %v644
        %v1788 = vunpack.c.l.b16 %v645
        %v1789 = vunpack.c.l.b16 %v646
        %v1790 = vunpack.c.l.b16 %v647
        %v1791 = vunpack.c.l.b16 %v648
        %v1792 = vunpack.c.l.b16 %v649
        %v1793 = vunpack.c.l.b16 %v650
        %v1794 = vunpack.c.l.b16 %v651
        %v1795 = vunpack.c.l.b16 %v652
        %v1796 = vunpack.c.l.b16 %v653
        %v1797 = vunpack.c.l.b16 %v654
        %v1798 = vunpack.c.l.b16 %v655
        %v1799 = vunpack.c.l.b16 %v656
        %v1800 = vunpack.c.l.b16 %v657
        %v1801 = vunpack.c.l.b16 %v658
        %v1802 = vunpack.c.l.b16 %v659
        %v1803 = vunpack.c.l.b16 %v660
        %v1804 = vunpack.c.l.b16 %v661
        %v1805 = vunpack.c.l.b16 %v662
        %v1806 = vunpack.c.l.b16 %v663
        %v1807 = vunpack.c.l.b16 %v664
        %v1808 = vunpack.c.l.b16 %v665
        %v1809 = vunpack.c.l.b16 %v666
        %v1810 = vunpack.c.l.b16 %v667
        %v1811 = vunpack.c.l.b16 %v668
        %v1812 = vunpack.c.l.b16 %v669
        %v1813 = vunpack.c.l.b16 %v670
        %v1814 = vunpack.c.l.b16 %v671
        %v1815 = vunpack.c.l.b16 %v672
        %v1816 = vunpack.c.l.b16 %v673
        %v1817 = vunpack.c.l.b16 %v674
        %v1818 = vunpack.c.l.b16 %v675
        %v1819 = vunpack.c.l.b16 %v676
        %v1820 = vunpack.c.l.b16 %v677
        %v1821 = vunpack.c.l.b16 %v678
        %v1822 = vunpack.c.l.b16 %v679
        %v1823 = vunpack.c.l.b16 %v680
        %v1824 = vunpack.c.l.b16 %v681
        %v1825 = vunpack.c.l.b16 %v682
        %v1826 = vunpack.c.l.b16 %v683
        %v1827 = vunpack.c.l.b16 %v684
        %v1828 = vunpack.c.l.b16 %v685
        %v1829 = vunpack.c.l.b16 %v686
        %v1830 = vunpack.c.l.b16 %v687
        %v1831 = vunpack.c.l.b16 %v688
        %v1832 = vunpack.c.l.b16 %v689
        %v1833 = vunpack.c.l.b16 %v690
        %v1834 = vunpack.c.l.b16 %v691
        %v1835 = vunpack.c.l.b16 %v692
        %v1836 = vunpack.c.l.b16 %v693
        %v1837 = vunpack.c.l.b16 %v694
        %v1838 = vunpack.c.l.b16 %v695
        %v1839 = vunpack.c.l.b16 %v696
        %v1840 = vunpack.c.l.b16 %v697
        %v1841 = vunpack.c.l.b16 %v698
        %v1842 = vunpack.c.l.b16 %v699
        %v1843 = vunpack.c.l.b16 %v700
        %v1844 = vunpack.c.l.b16 %v701
        %v1845 = vunpack.c.l.b16 %v702
        %v1846 = vunpack.c.l.b16 %v703
        %v1847 = vunpack.c.l.b16 %v704
        %v1848 = vunpack.c.l.b16 %v705
        %v1849 = vunpack.c.l.b16 %v706
        %v1850 = vunpack.c.l.b16 %v707
        %v1851 = vunpack.c.l.b16 %v708
        %v1852 = vunpack.c.l.b16 %v709
        %v1853 = vunpack.c.l.b16 %v710
        %v1854 = vunpack.c.l.b16 %v711
        %v1855 = vunpack.c.l.b16 %v712
        %v1856 = vunpack.c.l.b16 %v713
        %v1857 = vunpack.c.l.b16 %v714
        %v1858 = vunpack.c.l.b16 %v715
        %v1859 = vunpack.c.l.b16 %v716
        %v1860 = vunpack.c.l.b16 %v717
        %v1861 = vunpack.c.l.b16 %v718
        %v1862 = vunpack.c.l.b16 %v719
        %v1863 = vunpack.c.l.b16 %v720
        %v1864 = vunpack.c.l.b16 %v721
        %v1865 = vunpack.c.l.b16 %v722
        %v1866 = vunpack.c.l.b16 %v723
        %v1867 = vunpack.c.l.b16 %v724
        %v1868 = vunpack.c.l.b16 %v725
        %v1869 = vunpack.c.l.b16 %v726
        %v1870 = vunpack.c.l.b16 %v727
        %v1871 = vunpack.c.l.b16 %v728
        %v1872 = vunpack.c.l.b16 %v729
        %v1873 = vunpack.c.l.b16 %v730
        %v1874 = vunpack.c.l.b16 %v731
        %v1875 = vunpack.c.l.b16 %v732
        %v1876 = vunpack.c.l.b16 %v733
        %v1877 = vunpack.c.l.b16 %v734
        %v1878 = vunpack.c.l.b16 %v735
        %v1879 = vunpack.c.l.b16 %v736
        %v1880 = vunpack.c.l.b16 %v737
        %v1881 = vunpack.c.l.b16 %v738
        %v1882 = vunpack.c.l.b16 %v739
        %v1883 = vunpack.c.l.b16 %v740
        %v1884 = vunpack.c.l.b16 %v741
        %v1885 = vunpack.c.l.b16 %v742
        %v1886 = vunpack.c.l.b16 %v743
        %v1887 = vunpack.c.l.b16 %v744
        %v1888 = vunpack.c.l.b16 %v745
        %v1889 = vunpack.c.l.b16 %v746
        %v1890 = vunpack.c.l.b16 %v747
        %v1891 = vunpack.c.l.b16 %v748
        %v1892 = vunpack.c.l.b16 %v749
        %v1893 = vunpack.c.l.b16 %v750
        %v1894 = vunpack.c.l.b16 %v751
        %v1895 = vunpack.c.l.b16 %v752
        %v1896 = vunpack.c.l.b16 %v753
        %v1897 = vunpack.c.l.b16 %v754
        %v1898 = vunpack.c.l.b16 %v755
        %v1899 = vunpack.c.l.b16 %v756
        %v1900 = vunpack.c.l.b16 %v757
        %v1901 = vunpack.c.l.b16 %v758
        %v1902 = vunpack.c.l.b16 %v759
        %v1903 = vunpack.c.l.b16 %v760
        %v1904 = vunpack.c.l.b16 %v761
        %v1905 = vunpack.c.l.b16 %v762
        %v1906 = vunpack.c.l.b16 %v763
        %v1907 = vunpack.c.l.b16 %v764
        %v1908 = vunpack.c.l.b16 %v765
        %v1909 = vunpack.c.l.b16 %v766
        %v1910 = vunpack.c.l.b16 %v767
        %v1911 = vunpack.c.l.b16 %v768
        %v1912 = vunpack.c.l.b16 %v769
        %v1913 = vunpack.c.l.b16 %v770
        %v1914 = vunpack.c.l.b16 %v771
        %v1915 = vunpack.c.l.b16 %v772
        %v1916 = vunpack.c.l.b16 %v773
        %v1917 = vunpack.c.l.b16 %v774
        %v1918 = vunpack.c.l.b16 %v775
        %v1919 = vunpack.c.l.b16 %v776
        %v1920 = vunpack.c.l.b16 %v777
        %v1921 = vunpack.c.l.b16 %v778
        %v1922 = vunpack.c.l.b16 %v779
        %v1923 = vunpack.c.l.b16 %v780
        %v1924 = vunpack.c.l.b16 %v781
        %v1925 = vunpack.c.l.b16 %v782
        %v1926 = vunpack.c.l.b16 %v783
        %v1927 = vunpack.c.l.b16 %v784
        %v1928 = vunpack.c.l.b16 %v785
        %v1929 = vunpack.c.l.b16 %v786
        %v1930 = vunpack.c.l.b16 %v787
        %v1931 = vunpack.c.l.b16 %v788
        %v1932 = vunpack.c.l.b16 %v789
        %v1933 = vunpack.c.l.b16 %v790
        %v1934 = vunpack.c.l.b16 %v791
        %v1935 = vunpack.c.l.b16 %v792
        %v1936 = vunpack.c.l.b16 %v793
        %v1937 = vunpack.c.l.b16 %v794
        %v1938 = vunpack.c.l.b16 %v795
        %v1939 = vunpack.c.l.b16 %v796
        %v1940 = vunpack.c.l.b16 %v797
        %v1941 = vunpack.c.l.b16 %v798
        %v1942 = vunpack.c.l.b16 %v799
        %v1943 = vunpack.c.l.b16 %v800
        %v1944 = vunpack.c.l.b16 %v801
        %v1945 = vunpack.c.l.b16 %v802
        %v1946 = vunpack.c.l.b16 %v803
        %v1947 = vunpack.c.l.b16 %v804
        %v1948 = vunpack.c.l.b16 %v805
        %v1949 = vunpack.c.l.b16 %v806
        %v1950 = vunpack.c.l.b16 %v807
        %v1951 = vunpack.c.l.b16 %v808
        %v1952 = vunpack.c.l.b16 %v809
        %v1953 = vunpack.c.l.b16 %v810
        %v1954 = vunpack.c.l.b16 %v811
        %v1955 = vunpack.c.l.b16 %v812
        %v1956 = vunpack.c.l.b16 %v813
        %v1957 = vunpack.c.l.b16 %v814
        %v1958 = vunpack.c.l.b16 %v815
        %v1959 = vunpack.c.l.b16 %v816
        %v1960 = vunpack.c.l.b16 %v817
        %v1961 = vunpack.c.l.b16 %v818
        %v1962 = vunpack.c.l.b16 %v819
        %v1963 = vunpack.c.l.b16 %v820
        %v1964 = vunpack.c.l.b16 %v821
        %v1965 = vunpack.c.l.b16 %v822
        %v1966 = vpack.c.b16 %v1455, %v1454
        %v1967 = vpack.c.b16 %v1457, %v1456
        %v1968 = vpack.c.b16 %v1459, %v1458
        %v1969 = vpack.c.b16 %v1461, %v1460
        %v1970 = vpack.c.b16 %v1463, %v1462
        %v1971 = vpack.c.b16 %v1465, %v1464
        %v1972 = vpack.c.b16 %v1467, %v1466
        %v1973 = vpack.c.b16 %v1469, %v1468
        %v1974 = vpack.c.b16 %v1471, %v1470
        %v1975 = vpack.c.b16 %v1473, %v1472
        %v1976 = vpack.c.b16 %v1475, %v1474
        %v1977 = vpack.c.b16 %v1477, %v1476
        %v1978 = vpack.c.b16 %v1479, %v1478
        %v1979 = vpack.c.b16 %v1481, %v1480
        %v1980 = vpack.c.b16 %v1483, %v1482
        %v1981 = vpack.c.b16 %v1485, %v1484
        %v1982 = vpack.c.b16 %v1487, %v1486
        %v1983 = vpack.c.b16 %v1489, %v1488
        %v1984 = vpack.c.b16 %v1491, %v1490
        %v1985 = vpack.c.b16 %v1493, %v1492
        %v1986 = vpack.c.b16 %v1495, %v1494
        %v1987 = vpack.c.b16 %v1497, %v1496
        %v1988 = vpack.c.b16 %v1499, %v1498
        %v1989 = vpack.c.b16 %v1501, %v1500
        %v1990 = vpack.c.b16 %v1503, %v1502
        %v1991 = vpack.c.b16 %v1505, %v1504
        %v1992 = vpack.c.b16 %v1507, %v1506
        %v1993 = vpack.c.b16 %v1509, %v1508
        %v1994 = vpack.c.b16 %v1511, %v1510
        %v1995 = vpack.c.b16 %v1513, %v1512
        %v1996 = vpack.c.b16 %v1515, %v1514
        %v1997 = vpack.c.b16 %v1517, %v1516
        %v1998 = vpack.c.b16 %v1519, %v1518
        %v1999 = vpack.c.b16 %v1521, %v1520
        %v2000 = vpack.c.b16 %v1523, %v1522
        %v2001 = vpack.c.b16 %v1525, %v1524
        %v2002 = vpack.c.b16 %v1527, %v1526
        %v2003 = vpack.c.b16 %v1529, %v1528
        %v2004 = vpack.c.b16 %v1531, %v1530
        %v2005 = vpack.c.b16 %v1533, %v1532
        %v2006 = vpack.c.b16 %v1535, %v1534
        %v2007 = vpack.c.b16 %v1537, %v1536
        %v2008 = vpack.c.b16 %v1539, %v1538
        %v2009 = vpack.c.b16 %v1541, %v1540
        %v2010 = vpack.c.b16 %v1543, %v1542
        %v2011 = vpack.c.b16 %v1545, %v1544
        %v2012 = vpack.c.b16 %v1547, %v1546
        %v2013 = vpack.c.b16 %v1549, %v1548
        %v2014 = vpack.c.b16 %v1551, %v1550
        %v2015 = vpack.c.b16 %v1553, %v1552
        %v2016 = vpack.c.b16 %v1555, %v1554
        %v2017 = vpack.c.b16 %v1557, %v1556
        %v2018 = vpack.c.b16 %v1559, %v1558
        %v2019 = vpack.c.b16 %v1561, %v1560
        %v2020 = vpack.c.b16 %v1563, %v1562
        %v2021 = vpack.c.b16 %v1565, %v1564
        %v2022 = vpack.c.b16 %v1567, %v1566
        %v2023 = vpack.c.b16 %v1569, %v1568
        %v2024 = vpack.c.b16 %v1571, %v1570
        %v2025 = vpack.c.b16 %v1573, %v1572
        %v2026 = vpack.c.b16 %v1575, %v1574
        %v2027 = vpack.c.b16 %v1577, %v1576
        %v2028 = vpack.c.b16 %v1579, %v1578
        %v2029 = vpack.c.b16 %v1581, %v1580
        %v2030 = vpack.c.b16 %v1583, %v1582
        %v2031 = vpack.c.b16 %v1585, %v1584
        %v2032 = vpack.c.b16 %v1587, %v1586
        %v2033 = vpack.c.b16 %v1589, %v1588
        %v2034 = vpack.c.b16 %v1591, %v1590
        %v2035 = vpack.c.b16 %v1593, %v1592
        %v2036 = vpack.c.b16 %v1595, %v1594
        %v2037 = vpack.c.b16 %v1597, %v1596
        %v2038 = vpack.c.b16 %v1599, %v1598
        %v2039 = vpack.c.b16 %v1601, %v1600
        %v2040 = vpack.c.b16 %v1603, %v1602
        %v2041 = vpack.c.b16 %v1605, %v1604
        %v2042 = vpack.c.b16 %v1607, %v1606
        %v2043 = vpack.c.b16 %v1609, %v1608
        %v2044 = vpack.c.b16 %v1611, %v1610
        %v2045 = vpack.c.b16 %v1613, %v1612
        %v2046 = vpack.c.b16 %v1615, %v1614
        %v2047 = vpack.c.b16 %v1617, %v1616
        %v2048 = vpack.c.b16 %v1619, %v1618
        %v2049 = vpack.c.b16 %v1621, %v1620
        %v2050 = vpack.c.b16 %v1623, %v1622
        %v2051 = vpack.c.b16 %v1625, %v1624
        %v2052 = vpack.c.b16 %v1627, %v1626
        %v2053 = vpack.c.b16 %v1629, %v1628
        %v2054 = vpack.c.b16 %v1631, %v1630
        %v2055 = vpack.c.b16 %v1633, %v1632
        %v2056 = vpack.c.b16 %v1635, %v1634
        %v2057 = vpack.c.b16 %v1637, %v1636
        %v2058 = vpack.c.b16 %v1639, %v1638
        %v2059 = vpack.c.b16 %v1641, %v1640
        %v2060 = vpack.c.b16 %v1643, %v1642
        %v2061 = vpack.c.b16 %v1645, %v1644
        %v2062 = vpack.c.b16 %v1647, %v1646
        %v2063 = vpack.c.b16 %v1649, %v1648
        %v2064 = vpack.c.b16 %v1651, %v1650
        %v2065 = vpack.c.b16 %v1653, %v1652
        %v2066 = vpack.c.b16 %v1655, %v1654
        %v2067 = vpack.c.b16 %v1657, %v1656
        %v2068 = vpack.c.b16 %v1659, %v1658
        %v2069 = vpack.c.b16 %v1661, %v1660
        %v2070 = vpack.c.b16 %v1663, %v1662
        %v2071 = vpack.c.b16 %v1665, %v1664
        %v2072 = vpack.c.b16 %v1667, %v1666
        %v2073 = vpack.c.b16 %v1669, %v1668
        %v2074 = vpack.c.b16 %v1671, %v1670
        %v2075 = vpack.c.b16 %v1673, %v1672
        %v2076 = vpack.c.b16 %v1675, %v1674
        %v2077 = vpack.c.b16 %v1677, %v1676
        %v2078 = vpack.c.b16 %v1679, %v1678
        %v2079 = vpack.c.b16 %v1681, %v1680
        %v2080 = vpack.c.b16 %v1683, %v1682
        %v2081 = vpack.c.b16 %v1685, %v1684
        %v2082 = vpack.c.b16 %v1687, %v1686
        %v2083 = vpack.c.b16 %v1689, %v1688
        %v2084 = vpack.c.b16 %v1691, %v1690
        %v2085 = vpack.c.b16 %v1693, %v1692
        %v2086 = vpack.c.b16 %v1695, %v1694
        %v2087 = vpack.c.b16 %v1697, %v1696
        %v2088 = vpack.c.b16 %v1699, %v1698
        %v2089 = vpack.c.b16 %v1701, %v1700
        %v2090 = vpack.c.b16 %v1703, %v1702
        %v2091 = vpack.c.b16 %v1705, %v1704
        %v2092 = vpack.c.b16 %v1707, %v1706
        %v2093 = vpack.c.b16 %v1709, %v1708
        %v2094 = vpack.c.b16 %v1711, %v1710
        %v2095 = vpack.c.b16 %v1713, %v1712
        %v2096 = vpack.c.b16 %v1715, %v1714
        %v2097 = vpack.c.b16 %v1717, %v1716
        %v2098 = vpack.c.b16 %v1719, %v1718
        %v2099 = vpack.c.b16 %v1721, %v1720
        %v2100 = vpack.c.b16 %v1723, %v1722
        %v2101 = vpack.c.b16 %v1725, %v1724
        %v2102 = vpack.c.b16 %v1727, %v1726
        %v2103 = vpack.c.b16 %v1729, %v1728
        %v2104 = vpack.c.b16 %v1731, %v1730
        %v2105 = vpack.c.b16 %v1733, %v1732
        %v2106 = vpack.c.b16 %v1735, %v1734
        %v2107 = vpack.c.b16 %v1737, %v1736
        %v2108 = vpack.c.b16 %v1739, %v1738
        %v2109 = vpack.c.b16 %v1741, %v1740
        %v2110 = vpack.c.b16 %v1743, %v1742
        %v2111 = vpack.c.b16 %v1745, %v1744
        %v2112 = vpack.c.b16 %v1747, %v1746
        %v2113 = vpack.c.b16 %v1749, %v1748
        %v2114 = vpack.c.b16 %v1751, %v1750
        %v2115 = vpack.c.b16 %v1753, %v1752
        %v2116 = vpack.c.b16 %v1755, %v1754
        %v2117 = vpack.c.b16 %v1757, %v1756
        %v2118 = vpack.c.b16 %v1759, %v1758
        %v2119 = vpack.c.b16 %v1761, %v1760
        %v2120 = vpack.c.b16 %v1763, %v1762
        %v2121 = vpack.c.b16 %v1765, %v1764
        %v2122 = vpack.c.b16 %v1767, %v1766
        %v2123 = vpack.c.b16 %v1769, %v1768
        %v2124 = vpack.c.b16 %v1771, %v1770
        %v2125 = vpack.c.b16 %v1773, %v1772
        %v2126 = vpack.c.b16 %v1775, %v1774
        %v2127 = vpack.c.b16 %v1777, %v1776
        %v2128 = vpack.c.b16 %v1779, %v1778
        %v2129 = vpack.c.b16 %v1781, %v1780
        %v2130 = vpack.c.b16 %v1783, %v1782
        %v2131 = vpack.c.b16 %v1785, %v1784
        %v2132 = vpack.c.b16 %v1787, %v1786
        %v2133 = vpack.c.b16 %v1789, %v1788
        %v2134 = vpack.c.b16 %v1791, %v1790
        %v2135 = vpack.c.b16 %v1793, %v1792
        %v2136 = vpack.c.b16 %v1795, %v1794
        %v2137 = vpack.c.b16 %v1797, %v1796
        %v2138 = vpack.c.b16 %v1799, %v1798
        %v2139 = vpack.c.b16 %v1801, %v1800
        %v2140 = vpack.c.b16 %v1803, %v1802
        %v2141 = vpack.c.b16 %v1805, %v1804
        %v2142 = vpack.c.b16 %v1807, %v1806
        %v2143 = vpack.c.b16 %v1809, %v1808
        %v2144 = vpack.c.b16 %v1811, %v1810
        %v2145 = vpack.c.b16 %v1813, %v1812
        %v2146 = vpack.c.b16 %v1815, %v1814
        %v2147 = vpack.c.b16 %v1817, %v1816
        %v2148 = vpack.c.b16 %v1819, %v1818
        %v2149 = vpack.c.b16 %v1821, %v1820
        %v2150 = vpack.c.b16 %v1823, %v1822
        %v2151 = vpack.c.b16 %v1825, %v1824
        %v2152 = vpack.c.b16 %v1827, %v1826
        %v2153 = vpack.c.b16 %v1829, %v1828
        %v2154 = vpack.c.b16 %v1831, %v1830
        %v2155 = vpack.c.b16 %v1833, %v1832
        %v2156 = vpack.c.b16 %v1835, %v1834
        %v2157 = vpack.c.b16 %v1837, %v1836
        %v2158 = vpack.c.b16 %v1839, %v1838
        %v2159 = vpack.c.b16 %v1841, %v1840
        %v2160 = vpack.c.b16 %v1843, %v1842
        %v2161 = vpack.c.b16 %v1845, %v1844
        %v2162 = vpack.c.b16 %v1847, %v1846
        %v2163 = vpack.c.b16 %v1849, %v1848
        %v2164 = vpack.c.b16 %v1851, %v1850
        %v2165 = vpack.c.b16 %v1853, %v1852
        %v2166 = vpack.c.b16 %v1855, %v1854
        %v2167 = vpack.c.b16 %v1857, %v1856
        %v2168 = vpack.c.b16 %v1859, %v1858
        %v2169 = vpack.c.b16 %v1861, %v1860
        %v2170 = vpack.c.b16 %v1863, %v1862
        %v2171 = vpack.c.b16 %v1865, %v1864
        %v2172 = vpack.c.b16 %v1867, %v1866
        %v2173 = vpack.c.b16 %v1869, %v1868
        %v2174 = vpack.c.b16 %v1871, %v1870
        %v2175 = vpack.c.b16 %v1873, %v1872
        %v2176 = vpack.c.b16 %v1875, %v1874
        %v2177 = vpack.c.b16 %v1877, %v1876
        %v2178 = vpack.c.b16 %v1879, %v1878
        %v2179 = vpack.c.b16 %v1881, %v1880
        %v2180 = vpack.c.b16 %v1883, %v1882
        %v2181 = vpack.c.b16 %v1885, %v1884
        %v2182 = vpack.c.b16 %v1887, %v1886
        %v2183 = vpack.c.b16 %v1889, %v1888
        %v2184 = vpack.c.b16 %v1891, %v1890
        %v2185 = vpack.c.b16 %v1893, %v1892
        %v2186 = vpack.c.b16 %v1895, %v1894
        %v2187 = vpack.c.b16 %v1897, %v1896
        %v2188 = vpack.c.b16 %v1899, %v1898
        %v2189 = vpack.c.b16 %v1901, %v1900
        %v2190 = vpack.c.b16 %v1903, %v1902
        %v2191 = vpack.c.b16 %v1905, %v1904
        %v2192 = vpack.c.b16 %v1907, %v1906
        %v2193 = vpack.c.b16 %v1909, %v1908
        %v2194 = vpack.c.b16 %v1911, %v1910
        %v2195 = vpack.c.b16 %v1913, %v1912
        %v2196 = vpack.c.b16 %v1915, %v1914
        %v2197 = vpack.c.b16 %v1917, %v1916
        %v2198 = vpack.c.b16 %v1919, %v1918
        %v2199 = vpack.c.b16 %v1921, %v1920
        %v2200 = vpack.c.b16 %v1923, %v1922
        %v2201 = vpack.c.b16 %v1925, %v1924
        %v2202 = vpack.c.b16 %v1927, %v1926
        %v2203 = vpack.c.b16 %v1929, %v1928
        %v2204 = vpack.c.b16 %v1931, %v1930
        %v2205 = vpack.c.b16 %v1933, %v1932
        %v2206 = vpack.c.b16 %v1935, %v1934
        %v2207 = vpack.c.b16 %v1937, %v1936
        %v2208 = vpack.c.b16 %v1939, %v1938
        %v2209 = vpack.c.b16 %v1941, %v1940
        %v2210 = vpack.c.b16 %v1943, %v1942
        %v2211 = vpack.c.b16 %v1945, %v1944
        %v2212 = vpack.c.b16 %v1947, %v1946
        %v2213 = vpack.c.b16 %v1949, %v1948
        %v2214 = vpack.c.b16 %v1951, %v1950
        %v2215 = vpack.c.b16 %v1953, %v1952
        %v2216 = vpack.c.b16 %v1955, %v1954
        %v2217 = vpack.c.b16 %v1957, %v1956
        %v2218 = vpack.c.b16 %v1959, %v1958
        %v2219 = vpack.c.b16 %v1961, %v1960
        %v2220 = vpack.c.b16 %v1963, %v1962
        %v2221 = vpack.c.b16 %v1965, %v1964
        %2478 = vmatprep.subr.bf16.mxu0 0
        %2479 = vmatpush1.bf16.msra.mxu0 %v1966
        %2480 = vmatprep.subr.bf16.mxu0 0
        %2481 = vmatpush1.bf16.msra.mxu0 %v1967
        %2482 = vmatprep.subr.bf16.mxu0 0
        %2483 = vmatpush1.bf16.msra.mxu0 %v1968
        %2484 = vmatprep.subr.bf16.mxu0 0
        %2485 = vmatpush1.bf16.msra.mxu0 %v1969
        %2486 = vmatprep.subr.bf16.mxu0 0
        %2487 = vmatpush1.bf16.msra.mxu0 %v1970
        %2488 = vmatprep.subr.bf16.mxu0 0
        %2489 = vmatpush1.bf16.msra.mxu0 %v1971
        %2490 = vmatprep.subr.bf16.mxu0 0
        %2491 = vmatpush1.bf16.msra.mxu0 %v1972
        %2492 = vmatprep.subr.bf16.mxu0 0
        %2493 = vmatpush1.bf16.msra.mxu0 %v1973
        %2494 = vmatprep.subr.bf16.mxu0 0
        %2495 = vmatpush1.bf16.msra.mxu0 %v1974
        %2496 = vmatprep.subr.bf16.mxu0 0
        %2497 = vmatpush1.bf16.msra.mxu0 %v1975
        %2498 = vmatprep.subr.bf16.mxu0 0
        %2499 = vmatpush1.bf16.msra.mxu0 %v1976
        %2500 = vmatprep.subr.bf16.mxu0 0
        %2501 = vmatpush1.bf16.msra.mxu0 %v1977
        %2502 = vmatprep.subr.bf16.mxu0 0
        %2503 = vmatpush1.bf16.msra.mxu0 %v1978
        %2504 = vmatprep.subr.bf16.mxu0 0
        %2505 = vmatpush1.bf16.msra.mxu0 %v1979
        %2506 = vmatprep.subr.bf16.mxu0 0
        %2507 = vmatpush1.bf16.msra.mxu0 %v1980
        %2508 = vmatprep.subr.bf16.mxu0 0
        %2509 = vmatpush1.bf16.msra.mxu0 %v1981
        %2510 = vmatprep.mubr.bf16.mxu0 %v879
        %2511 = vmatmul.mubr.bf16.gmra.mrb[0].mxu0 %v878
        %v2512 = vpop.f32.mrb[0].mxu0
        %v2513 = vadd.f32 %v828, %v2512
        %v2514 = vpop.f32.mrb[0].mxu0
        %v2515 = vpop.f32.mrb[0].mxu0
        %v2516 = vpop.f32.mrb[0].mxu0
        %2517 = vdwg.mxu0
        %2518 = vmatprep.subr.bf16.mxu0 0
        %2519 = vmatpush1.bf16.msra.mxu0 %v1982
        %2520 = vmatprep.subr.bf16.mxu0 0
        %2521 = vmatpush1.bf16.msra.mxu0 %v1983
        %2522 = vmatprep.subr.bf16.mxu0 0
        %2523 = vmatpush1.bf16.msra.mxu0 %v1984
        %2524 = vmatprep.subr.bf16.mxu0 0
        %2525 = vmatpush1.bf16.msra.mxu0 %v1985
        %2526 = vmatprep.subr.bf16.mxu0 0
        %2527 = vmatpush1.bf16.msra.mxu0 %v1986
        %2528 = vmatprep.subr.bf16.mxu0 0
        %2529 = vmatpush1.bf16.msra.mxu0 %v1987
        %2530 = vmatprep.subr.bf16.mxu0 0
        %2531 = vmatpush1.bf16.msra.mxu0 %v1988
        %2532 = vmatprep.subr.bf16.mxu0 0
        %2533 = vmatpush1.bf16.msra.mxu0 %v1989
        %2534 = vmatprep.subr.bf16.mxu0 0
        %2535 = vmatpush1.bf16.msra.mxu0 %v1990
        %2536 = vmatprep.subr.bf16.mxu0 0
        %2537 = vmatpush1.bf16.msra.mxu0 %v1991
        %2538 = vmatprep.subr.bf16.mxu0 0
        %2539 = vmatpush1.bf16.msra.mxu0 %v1992
        %2540 = vmatprep.subr.bf16.mxu0 0
        %2541 = vmatpush1.bf16.msra.mxu0 %v1993
        %2542 = vmatprep.subr.bf16.mxu0 0
        %2543 = vmatpush1.bf16.msra.mxu0 %v1994
        %2544 = vmatprep.subr.bf16.mxu0 0
        %2545 = vmatpush1.bf16.msra.mxu0 %v1995
        %2546 = vmatprep.subr.bf16.mxu0 0
        %2547 = vmatpush1.bf16.msra.mxu0 %v1996
        %2548 = vmatprep.subr.bf16.mxu0 0
        %2549 = vmatpush1.bf16.msra.mxu0 %v1997
        %2550 = vmatprep.mubr.bf16.mxu0 %v881
        %2551 = vmatmul.mubr.bf16.gmra.mrb[0].mxu0 %v880
        %v2552 = vpop.f32.mrb[0].mxu0
        %v2553 = vadd.f32 %v2513, %v2552
        %v2554 = vpop.f32.mrb[0].mxu0
        %v2555 = vpop.f32.mrb[0].mxu0
        %v2556 = vpop.f32.mrb[0].mxu0
        %2557 = vdwg.mxu0
        %2558 = vmatprep.subr.bf16.mxu0 0
        %2559 = vmatpush1.bf16.msra.mxu0 %v1998
        %2560 = vmatprep.subr.bf16.mxu0 0
        %2561 = vmatpush1.bf16.msra.mxu0 %v1999
        %2562 = vmatprep.subr.bf16.mxu0 0
        %2563 = vmatpush1.bf16.msra.mxu0 %v2000
        %2564 = vmatprep.subr.bf16.mxu0 0
        %2565 = vmatpush1.bf16.msra.mxu0 %v2001
        %2566 = vmatprep.subr.bf16.mxu0 0
        %2567 = vmatpush1.bf16.msra.mxu0 %v2002
        %2568 = vmatprep.subr.bf16.mxu0 0
        %2569 = vmatpush1.bf16.msra.mxu0 %v2003
        %2570 = vmatprep.subr.bf16.mxu0 0
        %2571 = vmatpush1.bf16.msra.mxu0 %v2004
        %2572 = vmatprep.subr.bf16.mxu0 0
        %2573 = vmatpush1.bf16.msra.mxu0 %v2005
        %2574 = vmatprep.subr.bf16.mxu0 0
        %2575 = vmatpush1.bf16.msra.mxu0 %v2006
        %2576 = vmatprep.subr.bf16.mxu0 0
        %2577 = vmatpush1.bf16.msra.mxu0 %v2007
        %2578 = vmatprep.subr.bf16.mxu0 0
        %2579 = vmatpush1.bf16.msra.mxu0 %v2008
        %2580 = vmatprep.subr.bf16.mxu0 0
        %2581 = vmatpush1.bf16.msra.mxu0 %v2009
        %2582 = vmatprep.subr.bf16.mxu0 0
        %2583 = vmatpush1.bf16.msra.mxu0 %v2010
        %2584 = vmatprep.subr.bf16.mxu0 0
        %2585 = vmatpush1.bf16.msra.mxu0 %v2011
        %2586 = vmatprep.subr.bf16.mxu0 0
        %2587 = vmatpush1.bf16.msra.mxu0 %v2012
        %2588 = vmatprep.subr.bf16.mxu0 0
        %2589 = vmatpush1.bf16.msra.mxu0 %v2013
        %2590 = vmatprep.mubr.bf16.mxu0 %v883
        %2591 = vmatmul.mubr.bf16.gmra.mrb[0].mxu0 %v882
        %v2592 = vpop.f32.mrb[0].mxu0
        %v2593 = vadd.f32 %v2553, %v2592
        %v2594 = vpop.f32.mrb[0].mxu0
        %v2595 = vpop.f32.mrb[0].mxu0
        %v2596 = vpop.f32.mrb[0].mxu0
        %2597 = vdwg.mxu0
        %2598 = vmatprep.subr.bf16.mxu0 0
        %2599 = vmatpush1.bf16.msra.mxu0 %v2014
        %2600 = vmatprep.subr.bf16.mxu0 0
        %2601 = vmatpush1.bf16.msra.mxu0 %v2015
        %2602 = vmatprep.subr.bf16.mxu0 0
        %2603 = vmatpush1.bf16.msra.mxu0 %v2016
        %2604 = vmatprep.subr.bf16.mxu0 0
        %2605 = vmatpush1.bf16.msra.mxu0 %v2017
        %2606 = vmatprep.subr.bf16.mxu0 0
        %2607 = vmatpush1.bf16.msra.mxu0 %v2018
        %2608 = vmatprep.subr.bf16.mxu0 0
        %2609 = vmatpush1.bf16.msra.mxu0 %v2019
        %2610 = vmatprep.subr.bf16.mxu0 0
        %2611 = vmatpush1.bf16.msra.mxu0 %v2020
        %2612 = vmatprep.subr.bf16.mxu0 0
        %2613 = vmatpush1.bf16.msra.mxu0 %v2021
        %2614 = vmatprep.subr.bf16.mxu0 0
        %2615 = vmatpush1.bf16.msra.mxu0 %v2022
        %2616 = vmatprep.subr.bf16.mxu0 0
        %2617 = vmatpush1.bf16.msra.mxu0 %v2023
        %2618 = vmatprep.subr.bf16.mxu0 0
        %2619 = vmatpush1.bf16.msra.mxu0 %v2024
        %2620 = vmatprep.subr.bf16.mxu0 0
        %2621 = vmatpush1.bf16.msra.mxu0 %v2025
        %2622 = vmatprep.subr.bf16.mxu0 0
        %2623 = vmatpush1.bf16.msra.mxu0 %v2026
        %2624 = vmatprep.subr.bf16.mxu0 0
        %2625 = vmatpush1.bf16.msra.mxu0 %v2027
        %2626 = vmatprep.subr.bf16.mxu0 0
        %2627 = vmatpush1.bf16.msra.mxu0 %v2028
        %2628 = vmatprep.subr.bf16.mxu0 0
        %2629 = vmatpush1.bf16.msra.mxu0 %v2029
        %2630 = vmatprep.mubr.bf16.mxu0 %v885
        %2631 = vmatmul.mubr.bf16.gmra.mrb[0].mxu0 %v884
        %v2632 = vpop.f32.mrb[0].mxu0
        %v2633 = vadd.f32 %v2593, %v2632
        %v2634 = vpop.f32.mrb[0].mxu0
        %v2635 = vpop.f32.mrb[0].mxu0
        %v2636 = vpop.f32.mrb[0].mxu0
        %2637 = vdwg.mxu0
        %2638 = vmatprep.subr.bf16.mxu0 0
        %2639 = vmatpush1.bf16.msra.mxu0 %v2030
        %2640 = vmatprep.subr.bf16.mxu0 0
        %2641 = vmatpush1.bf16.msra.mxu0 %v2031
        %2642 = vmatprep.subr.bf16.mxu0 0
        %2643 = vmatpush1.bf16.msra.mxu0 %v2032
        %2644 = vmatprep.subr.bf16.mxu0 0
        %2645 = vmatpush1.bf16.msra.mxu0 %v2033
        %2646 = vmatprep.subr.bf16.mxu0 0
        %2647 = vmatpush1.bf16.msra.mxu0 %v2034
        %2648 = vmatprep.subr.bf16.mxu0 0
        %2649 = vmatpush1.bf16.msra.mxu0 %v2035
        %2650 = vmatprep.subr.bf16.mxu0 0
        %2651 = vmatpush1.bf16.msra.mxu0 %v2036
        %2652 = vmatprep.subr.bf16.mxu0 0
        %2653 = vmatpush1.bf16.msra.mxu0 %v2037
        %2654 = vmatprep.subr.bf16.mxu0 0
        %2655 = vmatpush1.bf16.msra.mxu0 %v2038
        %2656 = vmatprep.subr.bf16.mxu0 0
        %2657 = vmatpush1.bf16.msra.mxu0 %v2039
        %2658 = vmatprep.subr.bf16.mxu0 0
        %2659 = vmatpush1.bf16.msra.mxu0 %v2040
        %2660 = vmatprep.subr.bf16.mxu0 0
        %2661 = vmatpush1.bf16.msra.mxu0 %v2041
        %2662 = vmatprep.subr.bf16.mxu0 0
        %2663 = vmatpush1.bf16.msra.mxu0 %v2042
        %2664 = vmatprep.subr.bf16.mxu0 0
        %2665 = vmatpush1.bf16.msra.mxu0 %v2043
        %2666 = vmatprep.subr.bf16.mxu0 0
        %2667 = vmatpush1.bf16.msra.mxu0 %v2044
        %2668 = vmatprep.subr.bf16.mxu0 0
        %2669 = vmatpush1.bf16.msra.mxu0 %v2045
        %2670 = vmatprep.mubr.bf16.mxu0 %v887
        %2671 = vmatmul.mubr.bf16.gmra.mrb[0].mxu0 %v886
        %v2672 = vpop.f32.mrb[0].mxu0
        %v2673 = vadd.f32 %v2633, %v2672
        %v2674 = vpop.f32.mrb[0].mxu0
        %v2675 = vpop.f32.mrb[0].mxu0
        %v2676 = vpop.f32.mrb[0].mxu0
        %2677 = vdwg.mxu0
        %2678 = vmatprep.subr.bf16.mxu0 0
        %2679 = vmatpush1.bf16.msra.mxu0 %v2046
        %2680 = vmatprep.subr.bf16.mxu0 0
        %2681 = vmatpush1.bf16.msra.mxu0 %v2047
        %2682 = vmatprep.subr.bf16.mxu0 0
        %2683 = vmatpush1.bf16.msra.mxu0 %v2048
        %2684 = vmatprep.subr.bf16.mxu0 0
        %2685 = vmatpush1.bf16.msra.mxu0 %v2049
        %2686 = vmatprep.subr.bf16.mxu0 0
        %2687 = vmatpush1.bf16.msra.mxu0 %v2050
        %2688 = vmatprep.subr.bf16.mxu0 0
        %2689 = vmatpush1.bf16.msra.mxu0 %v2051
        %2690 = vmatprep.subr.bf16.mxu0 0
        %2691 = vmatpush1.bf16.msra.mxu0 %v2052
        %2692 = vmatprep.subr.bf16.mxu0 0
        %2693 = vmatpush1.bf16.msra.mxu0 %v2053
        %2694 = vmatprep.subr.bf16.mxu0 0
        %2695 = vmatpush1.bf16.msra.mxu0 %v2054
        %2696 = vmatprep.subr.bf16.mxu0 0
        %2697 = vmatpush1.bf16.msra.mxu0 %v2055
        %2698 = vmatprep.subr.bf16.mxu0 0
        %2699 = vmatpush1.bf16.msra.mxu0 %v2056
        %2700 = vmatprep.subr.bf16.mxu0 0
        %2701 = vmatpush1.bf16.msra.mxu0 %v2057
        %2702 = vmatprep.subr.bf16.mxu0 0
        %2703 = vmatpush1.bf16.msra.mxu0 %v2058
        %2704 = vmatprep.subr.bf16.mxu0 0
        %2705 = vmatpush1.bf16.msra.mxu0 %v2059
        %2706 = vmatprep.subr.bf16.mxu0 0
        %2707 = vmatpush1.bf16.msra.mxu0 %v2060
        %2708 = vmatprep.subr.bf16.mxu0 0
        %2709 = vmatpush1.bf16.msra.mxu0 %v2061
        %2710 = vmatprep.mubr.bf16.mxu0 %v889
        %2711 = vmatmul.mubr.bf16.gmra.mrb[0].mxu0 %v888
        %v2712 = vpop.f32.mrb[0].mxu0
        %v2713 = vadd.f32 %v2673, %v2712
        %v2714 = vpop.f32.mrb[0].mxu0
        %v2715 = vpop.f32.mrb[0].mxu0
        %v2716 = vpop.f32.mrb[0].mxu0
        %2717 = vdwg.mxu0
        %2718 = vmatprep.subr.bf16.mxu0 0
        %2719 = vmatpush1.bf16.msra.mxu0 %v2062
        %2720 = vmatprep.subr.bf16.mxu0 0
        %2721 = vmatpush1.bf16.msra.mxu0 %v2063
        %2722 = vmatprep.subr.bf16.mxu0 0
        %2723 = vmatpush1.bf16.msra.mxu0 %v2064
        %2724 = vmatprep.subr.bf16.mxu0 0
        %2725 = vmatpush1.bf16.msra.mxu0 %v2065
        %2726 = vmatprep.subr.bf16.mxu0 0
        %2727 = vmatpush1.bf16.msra.mxu0 %v2066
        %2728 = vmatprep.subr.bf16.mxu0 0
        %2729 = vmatpush1.bf16.msra.mxu0 %v2067
        %2730 = vmatprep.subr.bf16.mxu0 0
        %2731 = vmatpush1.bf16.msra.mxu0 %v2068
        %2732 = vmatprep.subr.bf16.mxu0 0
        %2733 = vmatpush1.bf16.msra.mxu0 %v2069
        %2734 = vmatprep.subr.bf16.mxu0 0
        %2735 = vmatpush1.bf16.msra.mxu0 %v2070
        %2736 = vmatprep.subr.bf16.mxu0 0
        %2737 = vmatpush1.bf16.msra.mxu0 %v2071
        %2738 = vmatprep.subr.bf16.mxu0 0
        %2739 = vmatpush1.bf16.msra.mxu0 %v2072
        %2740 = vmatprep.subr.bf16.mxu0 0
        %2741 = vmatpush1.bf16.msra.mxu0 %v2073
        %2742 = vmatprep.subr.bf16.mxu0 0
        %2743 = vmatpush1.bf16.msra.mxu0 %v2074
        %2744 = vmatprep.subr.bf16.mxu0 0
        %2745 = vmatpush1.bf16.msra.mxu0 %v2075
        %2746 = vmatprep.subr.bf16.mxu0 0
        %2747 = vmatpush1.bf16.msra.mxu0 %v2076
        %2748 = vmatprep.subr.bf16.mxu0 0
        %2749 = vmatpush1.bf16.msra.mxu0 %v2077
        %2750 = vmatprep.mubr.bf16.mxu0 %v891
        %2751 = vmatmul.mubr.bf16.gmra.mrb[0].mxu0 %v890
        %v2752 = vpop.f32.mrb[0].mxu0
        %v2753 = vadd.f32 %v2713, %v2752
        %v2754 = vpop.f32.mrb[0].mxu0
        %v2755 = vpop.f32.mrb[0].mxu0
        %v2756 = vpop.f32.mrb[0].mxu0
        %2757 = vdwg.mxu0
        %2758 = vmatprep.subr.bf16.mxu0 0
        %2759 = vmatpush1.bf16.msra.mxu0 %v2078
        %2760 = vmatprep.subr.bf16.mxu0 0
        %2761 = vmatpush1.bf16.msra.mxu0 %v2079
        %2762 = vmatprep.subr.bf16.mxu0 0
        %2763 = vmatpush1.bf16.msra.mxu0 %v2080
        %2764 = vmatprep.subr.bf16.mxu0 0
        %2765 = vmatpush1.bf16.msra.mxu0 %v2081
        %2766 = vmatprep.subr.bf16.mxu0 0
        %2767 = vmatpush1.bf16.msra.mxu0 %v2082
        %2768 = vmatprep.subr.bf16.mxu0 0
        %2769 = vmatpush1.bf16.msra.mxu0 %v2083
        %2770 = vmatprep.subr.bf16.mxu0 0
        %2771 = vmatpush1.bf16.msra.mxu0 %v2084
        %2772 = vmatprep.subr.bf16.mxu0 0
        %2773 = vmatpush1.bf16.msra.mxu0 %v2085
        %2774 = vmatprep.subr.bf16.mxu0 0
        %2775 = vmatpush1.bf16.msra.mxu0 %v2086
        %2776 = vmatprep.subr.bf16.mxu0 0
        %2777 = vmatpush1.bf16.msra.mxu0 %v2087
        %2778 = vmatprep.subr.bf16.mxu0 0
        %2779 = vmatpush1.bf16.msra.mxu0 %v2088
        %2780 = vmatprep.subr.bf16.mxu0 0
        %2781 = vmatpush1.bf16.msra.mxu0 %v2089
        %2782 = vmatprep.subr.bf16.mxu0 0
        %2783 = vmatpush1.bf16.msra.mxu0 %v2090
        %2784 = vmatprep.subr.bf16.mxu0 0
        %2785 = vmatpush1.bf16.msra.mxu0 %v2091
        %2786 = vmatprep.subr.bf16.mxu0 0
        %2787 = vmatpush1.bf16.msra.mxu0 %v2092
        %2788 = vmatprep.subr.bf16.mxu0 0
        %2789 = vmatpush1.bf16.msra.mxu0 %v2093
        %2790 = vmatprep.mubr.bf16.mxu0 %v893
        %2791 = vmatmul.mubr.bf16.gmra.mrb[0].mxu0 %v892
        %v2792 = vpop.f32.mrb[0].mxu0
        %v2793 = vadd.f32 %v2753, %v2792
        %v2794 = vpop.f32.mrb[0].mxu0
        %v2795 = vpop.f32.mrb[0].mxu0
        %v2796 = vpop.f32.mrb[0].mxu0
        %2797 = vdwg.mxu0
        %2798 = vmatprep.subr.bf16.mxu0 0
        %2799 = vmatpush1.bf16.msra.mxu0 %v2094
        %2800 = vmatprep.subr.bf16.mxu0 0
        %2801 = vmatpush1.bf16.msra.mxu0 %v2095
        %2802 = vmatprep.subr.bf16.mxu0 0
        %2803 = vmatpush1.bf16.msra.mxu0 %v2096
        %2804 = vmatprep.subr.bf16.mxu0 0
        %2805 = vmatpush1.bf16.msra.mxu0 %v2097
        %2806 = vmatprep.subr.bf16.mxu0 0
        %2807 = vmatpush1.bf16.msra.mxu0 %v2098
        %2808 = vmatprep.subr.bf16.mxu0 0
        %2809 = vmatpush1.bf16.msra.mxu0 %v2099
        %2810 = vmatprep.subr.bf16.mxu0 0
        %2811 = vmatpush1.bf16.msra.mxu0 %v2100
        %2812 = vmatprep.subr.bf16.mxu0 0
        %2813 = vmatpush1.bf16.msra.mxu0 %v2101
        %2814 = vmatprep.subr.bf16.mxu0 0
        %2815 = vmatpush1.bf16.msra.mxu0 %v2102
        %2816 = vmatprep.subr.bf16.mxu0 0
        %2817 = vmatpush1.bf16.msra.mxu0 %v2103
        %2818 = vmatprep.subr.bf16.mxu0 0
        %2819 = vmatpush1.bf16.msra.mxu0 %v2104
        %2820 = vmatprep.subr.bf16.mxu0 0
        %2821 = vmatpush1.bf16.msra.mxu0 %v2105
        %2822 = vmatprep.subr.bf16.mxu0 0
        %2823 = vmatpush1.bf16.msra.mxu0 %v2106
        %2824 = vmatprep.subr.bf16.mxu0 0
        %2825 = vmatpush1.bf16.msra.mxu0 %v2107
        %2826 = vmatprep.subr.bf16.mxu0 0
        %2827 = vmatpush1.bf16.msra.mxu0 %v2108
        %2828 = vmatprep.subr.bf16.mxu0 0
        %2829 = vmatpush1.bf16.msra.mxu0 %v2109
        %2830 = vmatprep.mubr.bf16.mxu0 %v895
        %2831 = vmatmul.mubr.bf16.gmra.mrb[0].mxu0 %v894
        %v2832 = vpop.f32.mrb[0].mxu0
        %v2833 = vadd.f32 %v2793, %v2832
        %v2834 = vpop.f32.mrb[0].mxu0
        %v2835 = vpop.f32.mrb[0].mxu0
        %v2836 = vpop.f32.mrb[0].mxu0
        %2837 = vdwg.mxu0
        %2838 = vmatprep.subr.bf16.mxu0 0
        %2839 = vmatpush1.bf16.msra.mxu0 %v2110
        %2840 = vmatprep.subr.bf16.mxu0 0
        %2841 = vmatpush1.bf16.msra.mxu0 %v2111
        %2842 = vmatprep.subr.bf16.mxu0 0
        %2843 = vmatpush1.bf16.msra.mxu0 %v2112
        %2844 = vmatprep.subr.bf16.mxu0 0
        %2845 = vmatpush1.bf16.msra.mxu0 %v2113
        %2846 = vmatprep.subr.bf16.mxu0 0
        %2847 = vmatpush1.bf16.msra.mxu0 %v2114
        %2848 = vmatprep.subr.bf16.mxu0 0
        %2849 = vmatpush1.bf16.msra.mxu0 %v2115
        %2850 = vmatprep.subr.bf16.mxu0 0
        %2851 = vmatpush1.bf16.msra.mxu0 %v2116
        %2852 = vmatprep.subr.bf16.mxu0 0
        %2853 = vmatpush1.bf16.msra.mxu0 %v2117
        %2854 = vmatprep.subr.bf16.mxu0 0
        %2855 = vmatpush1.bf16.msra.mxu0 %v2118
        %2856 = vmatprep.subr.bf16.mxu0 0
        %2857 = vmatpush1.bf16.msra.mxu0 %v2119
        %2858 = vmatprep.subr.bf16.mxu0 0
        %2859 = vmatpush1.bf16.msra.mxu0 %v2120
        %2860 = vmatprep.subr.bf16.mxu0 0
        %2861 = vmatpush1.bf16.msra.mxu0 %v2121
        %2862 = vmatprep.subr.bf16.mxu0 0
        %2863 = vmatpush1.bf16.msra.mxu0 %v2122
        %2864 = vmatprep.subr.bf16.mxu0 0
        %2865 = vmatpush1.bf16.msra.mxu0 %v2123
        %2866 = vmatprep.subr.bf16.mxu0 0
        %2867 = vmatpush1.bf16.msra.mxu0 %v2124
        %2868 = vmatprep.subr.bf16.mxu0 0
        %2869 = vmatpush1.bf16.msra.mxu0 %v2125
        %2870 = vmatprep.mubr.bf16.mxu0 %v897
        %2871 = vmatmul.mubr.bf16.gmra.mrb[0].mxu0 %v896
        %v2872 = vpop.f32.mrb[0].mxu0
        %v2873 = vadd.f32 %v2833, %v2872
        %v2874 = vpop.f32.mrb[0].mxu0
        %v2875 = vpop.f32.mrb[0].mxu0
        %v2876 = vpop.f32.mrb[0].mxu0
        %2877 = vdwg.mxu0
        %2878 = vmatprep.subr.bf16.mxu0 0
        %2879 = vmatpush1.bf16.msra.mxu0 %v2126
        %2880 = vmatprep.subr.bf16.mxu0 0
        %2881 = vmatpush1.bf16.msra.mxu0 %v2127
        %2882 = vmatprep.subr.bf16.mxu0 0
        %2883 = vmatpush1.bf16.msra.mxu0 %v2128
        %2884 = vmatprep.subr.bf16.mxu0 0
        %2885 = vmatpush1.bf16.msra.mxu0 %v2129
        %2886 = vmatprep.subr.bf16.mxu0 0
        %2887 = vmatpush1.bf16.msra.mxu0 %v2130
        %2888 = vmatprep.subr.bf16.mxu0 0
        %2889 = vmatpush1.bf16.msra.mxu0 %v2131
        %2890 = vmatprep.subr.bf16.mxu0 0
        %2891 = vmatpush1.bf16.msra.mxu0 %v2132
        %2892 = vmatprep.subr.bf16.mxu0 0
        %2893 = vmatpush1.bf16.msra.mxu0 %v2133
        %2894 = vmatprep.subr.bf16.mxu0 0
        %2895 = vmatpush1.bf16.msra.mxu0 %v2134
        %2896 = vmatprep.subr.bf16.mxu0 0
        %2897 = vmatpush1.bf16.msra.mxu0 %v2135
        %2898 = vmatprep.subr.bf16.mxu0 0
        %2899 = vmatpush1.bf16.msra.mxu0 %v2136
        %2900 = vmatprep.subr.bf16.mxu0 0
        %2901 = vmatpush1.bf16.msra.mxu0 %v2137
        %2902 = vmatprep.subr.bf16.mxu0 0
        %2903 = vmatpush1.bf16.msra.mxu0 %v2138
        %2904 = vmatprep.subr.bf16.mxu0 0
        %2905 = vmatpush1.bf16.msra.mxu0 %v2139
        %2906 = vmatprep.subr.bf16.mxu0 0
        %2907 = vmatpush1.bf16.msra.mxu0 %v2140
        %2908 = vmatprep.subr.bf16.mxu0 0
        %2909 = vmatpush1.bf16.msra.mxu0 %v2141
        %2910 = vmatprep.mubr.bf16.mxu0 %v899
        %2911 = vmatmul.mubr.bf16.gmra.mrb[0].mxu0 %v898
        %v2912 = vpop.f32.mrb[0].mxu0
        %v2913 = vadd.f32 %v2873, %v2912
        %v2914 = vpop.f32.mrb[0].mxu0
        %v2915 = vpop.f32.mrb[0].mxu0
        %v2916 = vpop.f32.mrb[0].mxu0
        %2917 = vdwg.mxu0
        %2918 = vmatprep.subr.bf16.mxu0 0
        %2919 = vmatpush1.bf16.msra.mxu0 %v2142
        %2920 = vmatprep.subr.bf16.mxu0 0
        %2921 = vmatpush1.bf16.msra.mxu0 %v2143
        %2922 = vmatprep.subr.bf16.mxu0 0
        %2923 = vmatpush1.bf16.msra.mxu0 %v2144
        %2924 = vmatprep.subr.bf16.mxu0 0
        %2925 = vmatpush1.bf16.msra.mxu0 %v2145
        %2926 = vmatprep.subr.bf16.mxu0 0
        %2927 = vmatpush1.bf16.msra.mxu0 %v2146
        %2928 = vmatprep.subr.bf16.mxu0 0
        %2929 = vmatpush1.bf16.msra.mxu0 %v2147
        %2930 = vmatprep.subr.bf16.mxu0 0
        %2931 = vmatpush1.bf16.msra.mxu0 %v2148
        %2932 = vmatprep.subr.bf16.mxu0 0
        %2933 = vmatpush1.bf16.msra.mxu0 %v2149
        %2934 = vmatprep.subr.bf16.mxu0 0
        %2935 = vmatpush1.bf16.msra.mxu0 %v2150
        %2936 = vmatprep.subr.bf16.mxu0 0
        %2937 = vmatpush1.bf16.msra.mxu0 %v2151
        %2938 = vmatprep.subr.bf16.mxu0 0
        %2939 = vmatpush1.bf16.msra.mxu0 %v2152
        %2940 = vmatprep.subr.bf16.mxu0 0
        %2941 = vmatpush1.bf16.msra.mxu0 %v2153
        %2942 = vmatprep.subr.bf16.mxu0 0
        %2943 = vmatpush1.bf16.msra.mxu0 %v2154
        %2944 = vmatprep.subr.bf16.mxu0 0
        %2945 = vmatpush1.bf16.msra.mxu0 %v2155
        %2946 = vmatprep.subr.bf16.mxu0 0
        %2947 = vmatpush1.bf16.msra.mxu0 %v2156
        %2948 = vmatprep.subr.bf16.mxu0 0
        %2949 = vmatpush1.bf16.msra.mxu0 %v2157
        %2950 = vmatprep.mubr.bf16.mxu0 %v901
        %2951 = vmatmul.mubr.bf16.gmra.mrb[0].mxu0 %v900
        %v2952 = vpop.f32.mrb[0].mxu0
        %v2953 = vadd.f32 %v2913, %v2952
        %v2954 = vpop.f32.mrb[0].mxu0
        %v2955 = vpop.f32.mrb[0].mxu0
        %v2956 = vpop.f32.mrb[0].mxu0
        %2957 = vdwg.mxu0
        %2958 = vmatprep.subr.bf16.mxu0 0
        %2959 = vmatpush1.bf16.msra.mxu0 %v2158
        %2960 = vmatprep.subr.bf16.mxu0 0
        %2961 = vmatpush1.bf16.msra.mxu0 %v2159
        %2962 = vmatprep.subr.bf16.mxu0 0
        %2963 = vmatpush1.bf16.msra.mxu0 %v2160
        %2964 = vmatprep.subr.bf16.mxu0 0
        %2965 = vmatpush1.bf16.msra.mxu0 %v2161
        %2966 = vmatprep.subr.bf16.mxu0 0
        %2967 = vmatpush1.bf16.msra.mxu0 %v2162
        %2968 = vmatprep.subr.bf16.mxu0 0
        %2969 = vmatpush1.bf16.msra.mxu0 %v2163
        %2970 = vmatprep.subr.bf16.mxu0 0
        %2971 = vmatpush1.bf16.msra.mxu0 %v2164
        %2972 = vmatprep.subr.bf16.mxu0 0
        %2973 = vmatpush1.bf16.msra.mxu0 %v2165
        %2974 = vmatprep.subr.bf16.mxu0 0
        %2975 = vmatpush1.bf16.msra.mxu0 %v2166
        %2976 = vmatprep.subr.bf16.mxu0 0
        %2977 = vmatpush1.bf16.msra.mxu0 %v2167
        %2978 = vmatprep.subr.bf16.mxu0 0
        %2979 = vmatpush1.bf16.msra.mxu0 %v2168
        %2980 = vmatprep.subr.bf16.mxu0 0
        %2981 = vmatpush1.bf16.msra.mxu0 %v2169
        %2982 = vmatprep.subr.bf16.mxu0 0
        %2983 = vmatpush1.bf16.msra.mxu0 %v2170
        %2984 = vmatprep.subr.bf16.mxu0 0
        %2985 = vmatpush1.bf16.msra.mxu0 %v2171
        %2986 = vmatprep.subr.bf16.mxu0 0
        %2987 = vmatpush1.bf16.msra.mxu0 %v2172
        %2988 = vmatprep.subr.bf16.mxu0 0
        %2989 = vmatpush1.bf16.msra.mxu0 %v2173
        %2990 = vmatprep.mubr.bf16.mxu0 %v903
        %2991 = vmatmul.mubr.bf16.gmra.mrb[0].mxu0 %v902
        %v2992 = vpop.f32.mrb[0].mxu0
        %v2993 = vadd.f32 %v2953, %v2992
        %v2994 = vpop.f32.mrb[0].mxu0
        %v2995 = vpop.f32.mrb[0].mxu0
        %v2996 = vpop.f32.mrb[0].mxu0
        %2997 = vdwg.mxu0
        %2998 = vmatprep.subr.bf16.mxu0 0
        %2999 = vmatpush1.bf16.msra.mxu0 %v2174
        %3000 = vmatprep.subr.bf16.mxu0 0
        %3001 = vmatpush1.bf16.msra.mxu0 %v2175
        %3002 = vmatprep.subr.bf16.mxu0 0
        %3003 = vmatpush1.bf16.msra.mxu0 %v2176
        %3004 = vmatprep.subr.bf16.mxu0 0
        %3005 = vmatpush1.bf16.msra.mxu0 %v2177
        %3006 = vmatprep.subr.bf16.mxu0 0
        %3007 = vmatpush1.bf16.msra.mxu0 %v2178
        %3008 = vmatprep.subr.bf16.mxu0 0
        %3009 = vmatpush1.bf16.msra.mxu0 %v2179
        %3010 = vmatprep.subr.bf16.mxu0 0
        %3011 = vmatpush1.bf16.msra.mxu0 %v2180
        %3012 = vmatprep.subr.bf16.mxu0 0
        %3013 = vmatpush1.bf16.msra.mxu0 %v2181
        %3014 = vmatprep.subr.bf16.mxu0 0
        %3015 = vmatpush1.bf16.msra.mxu0 %v2182
        %3016 = vmatprep.subr.bf16.mxu0 0
        %3017 = vmatpush1.bf16.msra.mxu0 %v2183
        %3018 = vmatprep.subr.bf16.mxu0 0
        %3019 = vmatpush1.bf16.msra.mxu0 %v2184
        %3020 = vmatprep.subr.bf16.mxu0 0
        %3021 = vmatpush1.bf16.msra.mxu0 %v2185
        %3022 = vmatprep.subr.bf16.mxu0 0
        %3023 = vmatpush1.bf16.msra.mxu0 %v2186
        %3024 = vmatprep.subr.bf16.mxu0 0
        %3025 = vmatpush1.bf16.msra.mxu0 %v2187
        %3026 = vmatprep.subr.bf16.mxu0 0
        %3027 = vmatpush1.bf16.msra.mxu0 %v2188
        %3028 = vmatprep.subr.bf16.mxu0 0
        %3029 = vmatpush1.bf16.msra.mxu0 %v2189
        %3030 = vmatprep.mubr.bf16.mxu0 %v905
        %3031 = vmatmul.mubr.bf16.gmra.mrb[0].mxu0 %v904
        %v3032 = vpop.f32.mrb[0].mxu0
        %v3033 = vadd.f32 %v2993, %v3032
        %v3034 = vpop.f32.mrb[0].mxu0
        %v3035 = vpop.f32.mrb[0].mxu0
        %v3036 = vpop.f32.mrb[0].mxu0
        %3037 = vdwg.mxu0
        %3038 = vmatprep.subr.bf16.mxu0 0
        %3039 = vmatpush1.bf16.msra.mxu0 %v2190
        %3040 = vmatprep.subr.bf16.mxu0 0
        %3041 = vmatpush1.bf16.msra.mxu0 %v2191
        %3042 = vmatprep.subr.bf16.mxu0 0
        %3043 = vmatpush1.bf16.msra.mxu0 %v2192
        %3044 = vmatprep.subr.bf16.mxu0 0
        %3045 = vmatpush1.bf16.msra.mxu0 %v2193
        %3046 = vmatprep.subr.bf16.mxu0 0
        %3047 = vmatpush1.bf16.msra.mxu0 %v2194
        %3048 = vmatprep.subr.bf16.mxu0 0
        %3049 = vmatpush1.bf16.msra.mxu0 %v2195
        %3050 = vmatprep.subr.bf16.mxu0 0
        %3051 = vmatpush1.bf16.msra.mxu0 %v2196
        %3052 = vmatprep.subr.bf16.mxu0 0
        %3053 = vmatpush1.bf16.msra.mxu0 %v2197
        %3054 = vmatprep.subr.bf16.mxu0 0
        %3055 = vmatpush1.bf16.msra.mxu0 %v2198
        %3056 = vmatprep.subr.bf16.mxu0 0
        %3057 = vmatpush1.bf16.msra.mxu0 %v2199
        %3058 = vmatprep.subr.bf16.mxu0 0
        %3059 = vmatpush1.bf16.msra.mxu0 %v2200
        %3060 = vmatprep.subr.bf16.mxu0 0
        %3061 = vmatpush1.bf16.msra.mxu0 %v2201
        %3062 = vmatprep.subr.bf16.mxu0 0
        %3063 = vmatpush1.bf16.msra.mxu0 %v2202
        %3064 = vmatprep.subr.bf16.mxu0 0
        %3065 = vmatpush1.bf16.msra.mxu0 %v2203
        %3066 = vmatprep.subr.bf16.mxu0 0
        %3067 = vmatpush1.bf16.msra.mxu0 %v2204
        %3068 = vmatprep.subr.bf16.mxu0 0
        %3069 = vmatpush1.bf16.msra.mxu0 %v2205
        %3070 = vmatprep.mubr.bf16.mxu0 %v907
        %3071 = vmatmul.mubr.bf16.gmra.mrb[0].mxu0 %v906
        %v3072 = vpop.f32.mrb[0].mxu0
        %v3073 = vadd.f32 %v3033, %v3072
        %v3074 = vpop.f32.mrb[0].mxu0
        %v3075 = vpop.f32.mrb[0].mxu0
        %v3076 = vpop.f32.mrb[0].mxu0
        %3077 = vdwg.mxu0
        %3078 = vmatprep.subr.bf16.mxu0 0
        %3079 = vmatpush1.bf16.msra.mxu0 %v2206
        %3080 = vmatprep.subr.bf16.mxu0 0
        %3081 = vmatpush1.bf16.msra.mxu0 %v2207
        %3082 = vmatprep.subr.bf16.mxu0 0
        %3083 = vmatpush1.bf16.msra.mxu0 %v2208
        %3084 = vmatprep.subr.bf16.mxu0 0
        %3085 = vmatpush1.bf16.msra.mxu0 %v2209
        %3086 = vmatprep.subr.bf16.mxu0 0
        %3087 = vmatpush1.bf16.msra.mxu0 %v2210
        %3088 = vmatprep.subr.bf16.mxu0 0
        %3089 = vmatpush1.bf16.msra.mxu0 %v2211
        %3090 = vmatprep.subr.bf16.mxu0 0
        %3091 = vmatpush1.bf16.msra.mxu0 %v2212
        %3092 = vmatprep.subr.bf16.mxu0 0
        %3093 = vmatpush1.bf16.msra.mxu0 %v2213
        %3094 = vmatprep.subr.bf16.mxu0 0
        %3095 = vmatpush1.bf16.msra.mxu0 %v2214
        %3096 = vmatprep.subr.bf16.mxu0 0
        %3097 = vmatpush1.bf16.msra.mxu0 %v2215
        %3098 = vmatprep.subr.bf16.mxu0 0
        %3099 = vmatpush1.bf16.msra.mxu0 %v2216
        %3100 = vmatprep.subr.bf16.mxu0 0
        %3101 = vmatpush1.bf16.msra.mxu0 %v2217
        %3102 = vmatprep.subr.bf16.mxu0 0
        %3103 = vmatpush1.bf16.msra.mxu0 %v2218
        %3104 = vmatprep.subr.bf16.mxu0 0
        %3105 = vmatpush1.bf16.msra.mxu0 %v2219
        %3106 = vmatprep.subr.bf16.mxu0 0
        %3107 = vmatpush1.bf16.msra.mxu0 %v2220
        %3108 = vmatprep.subr.bf16.mxu0 0
        %3109 = vmatpush1.bf16.msra.mxu0 %v2221
        %3110 = vmatprep.mubr.bf16.mxu0 %v909
        %3111 = vmatmul.mubr.bf16.gmra.mrb[0].mxu0 %v908
        %v3112 = vpop.f32.mrb[0].mxu0
        %v3113 = vadd.f32 %v3073, %v3112
        %v3114 = vpop.f32.mrb[0].mxu0
        %v3115 = vpop.f32.mrb[0].mxu0
        %v3116 = vpop.f32.mrb[0].mxu0
        %3117 = vdwg.mxu0
        %3118 = vst [vmem:[%s286] sm:$0xff] %v3113
        %v3119 = vpack.c.bf16 %v3113, %v3113
        %v3120 = vld [vmem:[%s3] sm:$0xf]
        %v3121 = vld [vmem:[%s3 + $0x4] sm:$0xf]
        %v3122 = vld [vmem:[%s3 + $0x8] sm:$0xf]
        %v3123 = vld [vmem:[%s3 + $0xc] sm:$0xf]
        %v3124 = vld [vmem:[%s3 + $0x10] sm:$0xf]
        %v3125 = vld [vmem:[%s3 + $0x14] sm:$0xf]
        %v3126 = vld [vmem:[%s3 + $0x18] sm:$0xf]
        %v3127 = vld [vmem:[%s3 + $0x1c] sm:$0xf]
        %v3128 = vld [vmem:[%s3 + $0x20] sm:$0xf]
        %v3129 = vld [vmem:[%s3 + $0x24] sm:$0xf]
        %v3130 = vld [vmem:[%s3 + $0x28] sm:$0xf]
        %v3131 = vld [vmem:[%s3 + $0x2c] sm:$0xf]
        %v3132 = vld [vmem:[%s3 + $0x30] sm:$0xf]
        %v3133 = vld [vmem:[%s3 + $0x34] sm:$0xf]
        %v3134 = vld [vmem:[%s3 + $0x38] sm:$0xf]
        %v3135 = vld [vmem:[%s3 + $0x3c] sm:$0xf]
        %v3136 = vld [vmem:[%s4] sm:$0x1]
        %v3138 = vlaneseq
        %v3139 = vshrl.u32 %v3138, 7
        %v3140 = vsub.s32 0, %v3139
        %v3141 = vrot.slane %v3136, %v3140
        %v3159 = vunpack.c.l.b16 %v3120
        %v3160 = vunpack.c.l.b16 %v3121
        %v3161 = vunpack.c.l.b16 %v3122
        %v3162 = vunpack.c.l.b16 %v3123
        %v3163 = vunpack.c.l.b16 %v3124
        %v3164 = vunpack.c.l.b16 %v3125
        %v3165 = vunpack.c.l.b16 %v3126
        %v3166 = vunpack.c.l.b16 %v3127
        %v3167 = vunpack.c.l.b16 %v3128
        %v3168 = vunpack.c.l.b16 %v3129
        %v3169 = vunpack.c.l.b16 %v3130
        %v3170 = vunpack.c.l.b16 %v3131
        %v3171 = vunpack.c.l.b16 %v3132
        %v3172 = vunpack.c.l.b16 %v3133
        %v3173 = vunpack.c.l.b16 %v3134
        %v3174 = vunpack.c.l.b16 %v3135
        %v3175 = vpack.c.b16 %v3160, %v3159
        %v3176 = vpack.c.b16 %v3162, %v3161
        %v3177 = vpack.c.b16 %v3164, %v3163
        %v3178 = vpack.c.b16 %v3166, %v3165
        %v3179 = vpack.c.b16 %v3168, %v3167
        %v3180 = vpack.c.b16 %v3170, %v3169
        %v3181 = vpack.c.b16 %v3172, %v3171
        %v3182 = vpack.c.b16 %v3174, %v3173
        %3191 = vmatprep.subr.bf16.mxu0 0
        %3192 = vmatpush1.bf16.msra.mxu0 %v3175
        %3193 = vmatprep.subr.bf16.mxu0 0
        %3194 = vmatpush1.bf16.msra.mxu0 %v3176
        %3195 = vmatprep.subr.bf16.mxu0 0
        %3196 = vmatpush1.bf16.msra.mxu0 %v3177
        %3197 = vmatprep.subr.bf16.mxu0 0
        %3198 = vmatpush1.bf16.msra.mxu0 %v3178
        %3199 = vmatprep.subr.bf16.mxu0 0
        %3200 = vmatpush1.bf16.msra.mxu0 %v3179
        %3201 = vmatprep.subr.bf16.mxu0 0
        %3202 = vmatpush1.bf16.msra.mxu0 %v3180
        %3203 = vmatprep.subr.bf16.mxu0 0
        %3204 = vmatpush1.bf16.msra.mxu0 %v3181
        %3205 = vmatprep.subr.bf16.mxu0 0
        %3206 = vmatpush1.bf16.msra.mxu0 %v3182
        %3207 = vmatprep.subr.bf16.mxu0 0
        %3208 = vmatpush1.bf16.msra.mxu0 0
        %3209 = vmatprep.subr.bf16.mxu0 0
        %3210 = vmatpush1.bf16.msra.mxu0 0
        %3211 = vmatprep.subr.bf16.mxu0 0
        %3212 = vmatpush1.bf16.msra.mxu0 0
        %3213 = vmatprep.subr.bf16.mxu0 0
        %3214 = vmatpush1.bf16.msra.mxu0 0
        %3215 = vmatprep.subr.bf16.mxu0 0
        %3216 = vmatpush1.bf16.msra.mxu0 0
        %3217 = vmatprep.subr.bf16.mxu0 0
        %3218 = vmatpush1.bf16.msra.mxu0 0
        %3219 = vmatprep.subr.bf16.mxu0 0
        %3220 = vmatpush1.bf16.msra.mxu0 0
        %3221 = vmatprep.subr.bf16.mxu0 0
        %3222 = vmatpush1.bf16.msra.mxu0 0
        %3223 = vmatprep.mubr.bf16.mxu0 0
        %3224 = vmatmul.mubr.bf16.gmra.mrb[0].mxu0 %v3119
        %v3225 = vpop.f32.mrb[0].mxu0
        %v3226 = vadd.f32 %v3141, %v3225
        %v3227 = vpop.f32.mrb[0].mxu0
        %v3228 = vpop.f32.mrb[0].mxu0
        %v3229 = vpop.f32.mrb[0].mxu0
        %3230 = vdwg.mxu0
        %vm3231 = vcmask 261120
        %3232 = vst.msk [vmem:[%s293] sm:$0xff] %vm3231, %v3226
        %s3233 = sand.u32 %s146, 1
        %s3234 = scalar_lea.sflag [#allocation4], %s3233
        %s3235 = sand.u32 %s146, 1
        %s3236 = smul.addr %s3235, 8
        %s3237 = scalar_lea.vmem [#allocation7], %s3236
        %s3238 = sand.u32 %s172, 1
        %s3239 = scalar_lea.sflag [#allocation9], %s3238
        %s3240 = sand.u32 %s172, 1
        %s3241 = smul.addr %s3240, 8
        %s3242 = scalar_lea.vmem [#allocation8], %s3241
        // Predicated region
        $region49: #{tpu_custom_call.1} parent=39 // pred_check
          %p3243 = pneg %p156
        $region50: #{tpu_custom_call.1} parent=39 // pred_check_branch
          %3245 = sbr.rel (%p3243) target = $region52
        $region51: #{tpu_custom_call.1} parent=39 // pred_region
          %s3247 = ssub.s32 128, 128
          %3248 = vsyncadd %s3234, %s3247
          %s3249 = smul.addr %s28, 128
          %s3250 = scalar_lea.hbm %s5, %s3249
          %s3252 = sshll.u32 %s3237, 4
          %s3253 = int_to_ptr.vmem [resolvable:$true] %s3252
          %3255 = dma.vmem_to_hbm [thread:$0]  %s3253, 128, %s3250, %s3234
        $region52: #{tpu_custom_call.1} parent=39 // pred_fallthru
          _
        // Predicated region
        $region53: #{tpu_custom_call.1} parent=39 // pred_check
          %p3256 = pneg %p182
        $region54: #{tpu_custom_call.1} parent=39 // pred_check_branch
          %3258 = sbr.rel (%p3256) target = $region56
        $region55: #{tpu_custom_call.1} parent=39 // pred_region
          %s3260 = ssub.s32 128, 128
          %3261 = vsyncadd %s3239, %s3260
          %s3262 = smul.addr %s28, 128
          %s3263 = scalar_lea.hbm %s6, %s3262
          %s3265 = sshll.u32 %s3242, 4
          %s3266 = int_to_ptr.vmem [resolvable:$true] %s3265
          %3268 = dma.vmem_to_hbm [thread:$0]  %s3266, 128, %s3263, %s3239
        $region56: #{tpu_custom_call.1} parent=39 // pred_fallthru
          _
      $region40: #{tpu_custom_call.1} parent=5 // pred_fallthru
        _
      %p3269 = scmp.le.s32.totalorder 2, %s23
      // Predicated region
      $region57: #{tpu_custom_call.1} parent=5 // pred_check
        %p3270 = pneg %p3269
      $region58: #{tpu_custom_call.1} parent=5 // pred_check_branch
        %3272 = sbr.rel (%p3270) target = $region60
      $region59: #{tpu_custom_call.1} parent=5 // pred_region
        %s3273 = ssub.s32 %s23, 2
        // Predicated region
        $region61: #{tpu_custom_call.1} parent=59 // pred_check
          %p3274 = pneg %p162
        $region62: #{tpu_custom_call.1} parent=59 // pred_check_branch
          %3276 = sbr.rel (%p3274) target = $region64
        $region63: #{tpu_custom_call.1} parent=59 // pred_region
          %s3277 = sand.u32 %s147, 1
          %s3278 = scalar_lea.sflag [#allocation4], %s3277
          %s3279 = sand.u32 %s147, 1
          %s3280 = smul.addr %s3279, 8
          %s3281 = scalar_lea.vmem [#allocation7], %s3280
          %3282 = dma.done %s3278, 128
        $region64: #{tpu_custom_call.1} parent=59 // pred_fallthru
          _
        // Predicated region
        $region65: #{tpu_custom_call.1} parent=59 // pred_check
          %p3283 = pneg %p188
        $region66: #{tpu_custom_call.1} parent=59 // pred_check_branch
          %3285 = sbr.rel (%p3283) target = $region68
        $region67: #{tpu_custom_call.1} parent=59 // pred_region
          %s3286 = sand.u32 %s173, 1
          %s3287 = scalar_lea.sflag [#allocation9], %s3286
          %s3288 = sand.u32 %s173, 1
          %s3289 = smul.addr %s3288, 8
          %s3290 = scalar_lea.vmem [#allocation8], %s3289
          %3291 = dma.done %s3287, 128
        $region68: #{tpu_custom_call.1} parent=59 // pred_fallthru
          _
      $region60: #{tpu_custom_call.1} parent=5 // pred_fallthru
        _
    $region6: #{tpu_custom_call.1} parent=1 // loop_footer
      %s27 = sadd.s32 1, %s23
    $region7: #{tpu_custom_call.1} parent=1 // loop_footer_branch
      %22 = sbr.rel target = $region3
    $region8: #{tpu_custom_call.1} parent=1 // loop_exit
      _
    %3292 = vsyncpa [#allocation3], 1
    %s3293 = scalar_lea.sflag [#allocation3], 1
    %3294 = vsyncpa %s3293, 1
    %3295 = vsyncpa [#allocation6], 1
    %3296 = vsyncpa [#allocation4], 1
    %s3297 = scalar_lea.sflag [#allocation4], 1
    %3298 = vsyncpa %s3297, 1
    %3299 = vsyncpa [#allocation9], 1
    %s3300 = scalar_lea.sflag [#allocation9], 1
    %3301 = vsyncpa %s3300, 1

</llo_original>
